<compile_context>
chip_gen: v7x
topology: tpu7x:2x2x1
jax: 0.10.0
libtpu: 0.0.40
codegen_flags: <defaults>
</compile_context>

<pallas_src>
import functools

import numpy as np
import jax
import jax.numpy as jnp
from jax import lax
from jax.experimental import pallas as pl
from jax.experimental.pallas import tpu as pltpu

KSIZE = 5
PAD = (KSIZE - 1) // 2
EPS = 1e-5


def _gelu_exact(x):
    # exact (erf) GELU; erf via Abramowitz-Stegun 7.1.26 (|err| < 1.5e-7)
    z = x * 0.7071067811865476
    az = jnp.abs(z)
    t = 1.0 / (1.0 + 0.3275911 * az)
    poly = t * (0.254829592 + t * (-0.284496736 + t * (1.421413741
               + t * (-1.453152027 + t * 1.061405429))))
    erf_abs = 1.0 - poly * jnp.exp(-az * az)
    erf_z = jnp.where(z >= 0, erf_abs, -erf_abs)
    return 0.5 * x * (1.0 + erf_z)


def _fdaf_kernel(C, H, W, xfp_ref, x1r_ref, x2r_ref, masks_ref, grid_ref,
                 rowsel_ref, chansum_ref, dww_ref, dwb_ref, pww_ref,
                 o1_ref, o2_ref):
    """Fused flow_make + dual warp for one batch element (all lane-dense).

    xfp_ref    : (1, 2C, (H+4)*W+4)  zero-padded flattened concat(x1, x2)
    x1r_ref    : (1, C*H, W)         x1 as rows (for the warp MXU contraction)
    x2r_ref    : (1, C*H, W)
    masks_ref  : (5, HW)             width-boundary mask per horizontal tap
    grid_ref   : (2, HW)             base sampling grid (gx, gy) in [-1, 1]
    rowsel_ref : (C*H, H)            T[r,h] = [h == r % H]   (tiles Wy over c)
    chansum_ref: (C, C*H)            S[c,r] = [r // H == c]  (sum over h)
    dww_ref    : (2C, 25)  dwb_ref: (2C, 1)  pww_ref: (4, 2C)
    o1_ref, o2_ref: (1, C, HW)       warp(x1,f1)-x2 and warp(x2,f2)-x1
    """
    C2 = 2 * C
    HW = H * W
    OFF = PAD * W + PAD          # flat offset of pixel (0, 0) in the padded buffer

    xfp = xfp_ref[0]             # (2C, LP)
    dww = dww_ref[...]           # (2C, 25)
    masks = masks_ref[...]       # (5, HW)

    # ---- depthwise 5x5 conv, channel-vectorized: 25 static lane slices ----
    # conv bias folded into the accumulator init.
    acc = jnp.broadcast_to(dwb_ref[...], (C2, HW)).astype(jnp.float32)
    for ky in range(KSIZE):
        for kx in range(KSIZE):
            s = ky * W + kx                         # padded-flat shift of this tap
            tap = xfp[:, s:s + HW]                  # (2C, HW), zeros handle H edges
            if kx != PAD:                           # mask W-edge row wrap-around
                tap = tap * masks[kx:kx + 1, :]
            t = ky * KSIZE + kx
            acc = acc + dww[:, t:t + 1] * tap       # (2C,1) broadcast FMA

    # ---- InstanceNorm2d (affine=False, biased var) + GELU ----
    mean = jnp.mean(acc, axis=1, keepdims=True)
    var = jnp.mean((acc - mean) ** 2, axis=1, keepdims=True)
    g = _gelu_exact((acc - mean) * lax.rsqrt(var + EPS))         # (2C, HW)

    # ---- 1x1 conv (2C -> 4) as an MXU matmul; flow stays in VMEM ----
    flow = jnp.dot(pww_ref[...], g, preferred_element_type=jnp.float32)  # (4, HW)

    # ---- separable bilinear warp (grid_sample, zeros pad, align_corners) ----
    gx = grid_ref[0:1, :]
    gy = grid_ref[1:2, :]

    # hoisted index matrices (built once, shared by both warps)
    ids_w = lax.broadcasted_iota(jnp.int32, (W, HW), 0)
    ids_h = lax.broadcasted_iota(jnp.int32, (H, HW), 0)

    def onehot_weights(coord, ids):
        # M[r, p] = bilinear weight of source row/col r for output pixel p.
        # Out-of-range corners never match the iota -> exact zeros padding.
        c0f = jnp.floor(coord)
        c0 = c0f.astype(jnp.int32)
        w1 = coord - c0f
        return (jnp.where(ids == c0, 1.0 - w1, 0.0)
                + jnp.where(ids == c0 + 1, w1, 0.0))

    rowsel = rowsel_ref[...]      # (C*H, H)
    chansum = chansum_ref[...]    # (C, C*H)

    def warp(xrows, fx, fy):
        ix = (gx + fx * (1.0 / W) + 1.0) * (0.5 * (W - 1))
        iy = (gy + fy * (1.0 / H) + 1.0) * (0.5 * (H - 1))
        wx = onehot_weights(ix, ids_w)                               # (W, HW)
        wy = onehot_weights(iy, ids_h)                               # (H, HW)
        a = jnp.dot(xrows, wx, preferred_element_type=jnp.float32)   # (C*H, HW)
        wy_rows = jnp.dot(rowsel, wy,
                          preferred_element_type=jnp.float32)        # (C*H, HW)
        # out[c,p] = sum_h wy[h,p] * a[c*H+h,p]  (done as one more MXU matmul)
        return jnp.dot(chansum, wy_rows * a,
                       preferred_element_type=jnp.float32)           # (C, HW)

    w1_ = warp(x1r_ref[0], flow[0:1, :], flow[1:2, :])
    w2_ = warp(x2r_ref[0], flow[2:3, :], flow[3:4, :])

    x1_flat = xfp[:C, OFF:OFF + HW]
    x2_flat = xfp[C:, OFF:OFF + HW]
    o1_ref[0] = w1_ - x2_flat
    o2_ref[0] = w2_ - x1_flat


def fdaf_forward(x1, x2, dw_w, dw_b, pw_w):
    N, C, H, W = x1.shape
    C2 = 2 * C
    HW = H * W
    side = PAD * W + PAD                  # zeros prepended / appended to the flat map
    LP = HW + 2 * side                    # = (H+4)*W + 4

    # Single padded-flat buffer (concat is folded into the required pad write).
    xcat = jnp.concatenate([x1, x2], axis=1).reshape(N, C2, HW)
    xfp = jnp.pad(xcat, ((0, 0), (0, 0), (side, side)))
    x1_rows = x1.reshape(N, C * H, W)     # free row-major reshapes
    x2_rows = x2.reshape(N, C * H, W)

    # Width-boundary masks for the 5 horizontal tap offsets (static constants).
    wpos = np.arange(HW) % W
    dxs = np.arange(KSIZE) - PAD
    masks = ((wpos[None, :] + dxs[:, None] >= 0)
             & (wpos[None, :] + dxs[:, None] < W)).astype(np.float32)

    # Base sampling grid: row 0 = x in [-1,1], row 1 = y in [-1,1].
    gxv = np.tile(np.linspace(-1.0, 1.0, W), H)
    gyv = np.repeat(np.linspace(-1.0, 1.0, H), W)
    grid_base = np.stack([gxv, gyv]).astype(np.float32)              # (2, HW)

    # Constant selector matrices for the separable warp's h-reduction.
    r = np.arange(C * H)
    rowsel = np.zeros((C * H, H), np.float32)
    rowsel[r, r % H] = 1.0
    chansum = np.zeros((C, C * H), np.float32)
    chansum[r // H, r] = 1.0

    o1, o2 = pl.pallas_call(
        functools.partial(_fdaf_kernel, C, H, W),
        out_shape=(jax.ShapeDtypeStruct((N, C, HW), jnp.float32),
                   jax.ShapeDtypeStruct((N, C, HW), jnp.float32)),
        grid=(N,),
        in_specs=[
            pl.BlockSpec((1, C2, LP), lambda n: (n, 0, 0)),
            pl.BlockSpec((1, C * H, W), lambda n: (n, 0, 0)),
            pl.BlockSpec((1, C * H, W), lambda n: (n, 0, 0)),
            pl.BlockSpec((KSIZE, HW), lambda n: (0, 0)),
            pl.BlockSpec((2, HW), lambda n: (0, 0)),
            pl.BlockSpec((C * H, H), lambda n: (0, 0)),
            pl.BlockSpec((C, C * H), lambda n: (0, 0)),
            pl.BlockSpec((C2, KSIZE * KSIZE), lambda n: (0, 0)),
            pl.BlockSpec((C2, 1), lambda n: (0, 0)),
            pl.BlockSpec((4, C2), lambda n: (0, 0)),
        ],
        out_specs=(pl.BlockSpec((1, C, HW), lambda n: (n, 0, 0)),
                   pl.BlockSpec((1, C, HW), lambda n: (n, 0, 0))),
        compiler_params=pltpu.CompilerParams(
            dimension_semantics=("parallel",)),
    )(xfp, x1_rows, x2_rows, jnp.asarray(masks), jnp.asarray(grid_base),
      jnp.asarray(rowsel), jnp.asarray(chansum),
      dw_w, dw_b.reshape(C2, 1), pw_w)

    x1_feat = o1.reshape(N, C, H, W)
    x2_feat = o2.reshape(N, C, H, W)
    return jnp.concatenate([x1_feat, x2_feat], axis=0)   # torch.cat default dim=0


# ---------------- pure-JAX reference (for correctness check) ----------------
def fdaf_reference(x1, x2, dw_w, dw_b, pw_w):
    N, C, H, W = x1.shape
    C2 = 2 * C
    xcat = jnp.concatenate([x1, x2], axis=1)
    w = dw_w.reshape(C2, 1, KSIZE, KSIZE)
    y = lax.conv_general_dilated(xcat, w, (1, 1), ((PAD, PAD), (PAD, PAD)),
                                 dimension_numbers=("NCHW", "OIHW", "NCHW"),
                                 feature_group_count=C2)
    y = y + dw_b[None, :, None, None]
    mean = y.mean(axis=(2, 3), keepdims=True)
    var = ((y - mean) ** 2).mean(axis=(2, 3), keepdims=True)
    y = (y - mean) / jnp.sqrt(var + EPS)
    y = 0.5 * y * (1.0 + jax.scipy.special.erf(y * 0.7071067811865476))
    flow = jnp.einsum("kc,nchw->nkhw", pw_w, y)
    f1, f2 = flow[:, 0:2], flow[:, 2:4]

    def warp(x, f):
        ww = jnp.linspace(-1.0, 1.0, W)
        hh = jnp.linspace(-1.0, 1.0, H)
        gx = jnp.broadcast_to(ww[None, :], (H, W))
        gy = jnp.broadcast_to(hh[:, None], (H, W))
        ix = (gx[None] + f[:, 0] / W + 1.0) * 0.5 * (W - 1)
        iy = (gy[None] + f[:, 1] / H + 1.0) * 0.5 * (H - 1)
        x0f = jnp.floor(ix)
        y0f = jnp.floor(iy)
        x0 = x0f.astype(jnp.int32)
        y0 = y0f.astype(jnp.int32)
        wx1 = ix - x0f
        wx0 = 1.0 - wx1
        wy1 = iy - y0f
        wy0 = 1.0 - wy1

        def corner(yc, xc, wt):
            valid = (xc >= 0) & (xc < W) & (yc >= 0) & (yc < H)
            ycc = jnp.clip(yc, 0, H - 1)
            xcc = jnp.clip(xc, 0, W - 1)
            g = jax.vmap(lambda xb, yb, xbi: xb[:, yb, xbi])(x, ycc, xcc)
            return g * (wt * valid)[:, None]

        return (corner(y0, x0, wy0 * wx0) + corner(y0, x0 + 1, wy0 * wx1)
                + corner(y0 + 1, x0, wy1 * wx0) + corner(y0 + 1, x0 + 1, wy1 * wx1))

    x1_feat = warp(x1, f1) - x2
    x2_feat = warp(x2, f2) - x1
    return jnp.concatenate([x1_feat, x2_feat], axis=0)


if __name__ == "__main__":
    N, C, H, W = 2, 4, 16, 16      # in_channels = 4
    key = jax.random.PRNGKey(0)
    k1, k2, k3, k4, k5 = jax.random.split(key, 5)
    # deterministic synthetic parameters (shapes from FDAF.__init__)
    dw_w = (0.2 * jax.random.normal(k1, (2 * C, KSIZE * KSIZE))).astype(jnp.float32)
    dw_b = (0.1 * jax.random.normal(k2, (2 * C,))).astype(jnp.float32)
    pw_w = (0.5 * jax.random.normal(k3, (4, 2 * C))).astype(jnp.float32)
    x1 = jax.random.normal(k4, (N, C, H, W), dtype=jnp.float32)
    x2 = jax.random.normal(k5, (N, C, H, W), dtype=jnp.float32)

    out = jax.jit(fdaf_forward)(x1, x2, dw_w, dw_b, pw_w)
    out = jax.block_until_ready(out)

    ref = fdaf_reference(x1, x2, dw_w, dw_b, pw_w)
    np.testing.assert_allclose(np.asarray(out), np.asarray(ref),
                               atol=1e-3, rtol=1e-3)
    print("KERNEL_OK")
</pallas_src>

<mosaic_0001>
module attributes {stable_mosaic.version = 11 : i64} {
  func.func @_fdaf_kernel(%arg0: i32, %arg1: memref<1x8x324xf32, #tpu.memory_space<vmem>>, %arg2: memref<1x64x16xf32, #tpu.memory_space<vmem>>, %arg3: memref<1x64x16xf32, #tpu.memory_space<vmem>>, %arg4: memref<5x256xf32, #tpu.memory_space<vmem>>, %arg5: memref<2x256xf32, #tpu.memory_space<vmem>>, %arg6: memref<64x16xf32, #tpu.memory_space<vmem>>, %arg7: memref<4x64xf32, #tpu.memory_space<vmem>>, %arg8: memref<8x25xf32, #tpu.memory_space<vmem>>, %arg9: memref<8x1xf32, #tpu.memory_space<vmem>>, %arg10: memref<4x8xf32, #tpu.memory_space<vmem>>, %arg11: memref<1x4x256xf32, #tpu.memory_space<vmem>>, %arg12: memref<1x4x256xf32, #tpu.memory_space<vmem>>) attributes {dimension_semantics = [#tpu.dimension_semantics<parallel>], iteration_bounds = array<i64: 2>, scalar_prefetch = 0 : i64, scratch_operands = 0 : i64, tpu.core_type = #tpu.core_type<tc>, window_params = [{transform_indices = @transform_0, window_bounds = array<i64: 1, 8, 324>}, {transform_indices = @transform_1, window_bounds = array<i64: 1, 64, 16>}, {transform_indices = @transform_2, window_bounds = array<i64: 1, 64, 16>}, {pipeline_mode = #tpu.pipeline_mode<synchronous>, transform_indices = @transform_3, window_bounds = array<i64: 5, 256>}, {pipeline_mode = #tpu.pipeline_mode<synchronous>, transform_indices = @transform_4, window_bounds = array<i64: 2, 256>}, {pipeline_mode = #tpu.pipeline_mode<synchronous>, transform_indices = @transform_5, window_bounds = array<i64: 64, 16>}, {pipeline_mode = #tpu.pipeline_mode<synchronous>, transform_indices = @transform_6, window_bounds = array<i64: 4, 64>}, {pipeline_mode = #tpu.pipeline_mode<synchronous>, transform_indices = @transform_7, window_bounds = array<i64: 8, 25>}, {pipeline_mode = #tpu.pipeline_mode<synchronous>, transform_indices = @transform_8, window_bounds = array<i64: 8, 1>}, {pipeline_mode = #tpu.pipeline_mode<synchronous>, transform_indices = @transform_9, window_bounds = array<i64: 4, 8>}, {transform_indices = @transform_10, window_bounds = array<i64: 1, 4, 256>}, {transform_indices = @transform_11, window_bounds = array<i64: 1, 4, 256>}]} {
    %c0 = arith.constant 0 : index
    %c0_0 = arith.constant 0 : index
    %c0_1 = arith.constant 0 : index
    %0 = vector.load %arg1[%c0, %c0_0, %c0_1] : memref<1x8x324xf32, #tpu.memory_space<vmem>>, vector<1x8x324xf32>
    %1 = vector.shape_cast %0 : vector<1x8x324xf32> to vector<8x324xf32>
    %c0_2 = arith.constant 0 : index
    %c0_3 = arith.constant 0 : index
    %2 = vector.load %arg8[%c0_2, %c0_3] : memref<8x25xf32, #tpu.memory_space<vmem>>, vector<8x25xf32>
    %c0_4 = arith.constant 0 : index
    %c0_5 = arith.constant 0 : index
    %3 = vector.load %arg4[%c0_4, %c0_5] : memref<5x256xf32, #tpu.memory_space<vmem>>, vector<5x256xf32>
    %c0_6 = arith.constant 0 : index
    %c0_7 = arith.constant 0 : index
    %4 = vector.load %arg9[%c0_6, %c0_7] : memref<8x1xf32, #tpu.memory_space<vmem>>, vector<8x1xf32>
    %5 = vector.shape_cast %4 : vector<8x1xf32> to vector<8x1xf32>
    %6 = vector.broadcast %5 : vector<8x1xf32> to vector<8x256xf32>
    %7 = vector.extract_strided_slice %1 {offsets = [0, 0], sizes = [8, 256], strides = [1, 1]} : vector<8x324xf32> to vector<8x256xf32>
    %8 = vector.extract_strided_slice %3 {offsets = [0, 0], sizes = [1, 256], strides = [1, 1]} : vector<5x256xf32> to vector<1x256xf32>
    %9 = vector.broadcast %8 : vector<1x256xf32> to vector<8x256xf32>
    %10 = arith.mulf %7, %9 : vector<8x256xf32>
    %11 = vector.extract_strided_slice %2 {offsets = [0, 0], sizes = [8, 1], strides = [1, 1]} : vector<8x25xf32> to vector<8x1xf32>
    %12 = vector.broadcast %11 : vector<8x1xf32> to vector<8x256xf32>
    %13 = arith.mulf %12, %10 : vector<8x256xf32>
    %14 = arith.addf %6, %13 : vector<8x256xf32>
    %15 = vector.extract_strided_slice %1 {offsets = [0, 1], sizes = [8, 256], strides = [1, 1]} : vector<8x324xf32> to vector<8x256xf32>
    %16 = vector.extract_strided_slice %3 {offsets = [1, 0], sizes = [1, 256], strides = [1, 1]} : vector<5x256xf32> to vector<1x256xf32>
    %17 = vector.broadcast %16 : vector<1x256xf32> to vector<8x256xf32>
    %18 = arith.mulf %15, %17 : vector<8x256xf32>
    %19 = vector.extract_strided_slice %2 {offsets = [0, 1], sizes = [8, 1], strides = [1, 1]} : vector<8x25xf32> to vector<8x1xf32>
    %20 = vector.broadcast %19 : vector<8x1xf32> to vector<8x256xf32>
    %21 = arith.mulf %20, %18 : vector<8x256xf32>
    %22 = arith.addf %14, %21 : vector<8x256xf32>
    %23 = vector.extract_strided_slice %1 {offsets = [0, 2], sizes = [8, 256], strides = [1, 1]} : vector<8x324xf32> to vector<8x256xf32>
    %24 = vector.extract_strided_slice %2 {offsets = [0, 2], sizes = [8, 1], strides = [1, 1]} : vector<8x25xf32> to vector<8x1xf32>
    %25 = vector.broadcast %24 : vector<8x1xf32> to vector<8x256xf32>
    %26 = arith.mulf %25, %23 : vector<8x256xf32>
    %27 = arith.addf %22, %26 : vector<8x256xf32>
    %28 = vector.extract_strided_slice %1 {offsets = [0, 3], sizes = [8, 256], strides = [1, 1]} : vector<8x324xf32> to vector<8x256xf32>
    %29 = vector.extract_strided_slice %3 {offsets = [3, 0], sizes = [1, 256], strides = [1, 1]} : vector<5x256xf32> to vector<1x256xf32>
    %30 = vector.broadcast %29 : vector<1x256xf32> to vector<8x256xf32>
    %31 = arith.mulf %28, %30 : vector<8x256xf32>
    %32 = vector.extract_strided_slice %2 {offsets = [0, 3], sizes = [8, 1], strides = [1, 1]} : vector<8x25xf32> to vector<8x1xf32>
    %33 = vector.broadcast %32 : vector<8x1xf32> to vector<8x256xf32>
    %34 = arith.mulf %33, %31 : vector<8x256xf32>
    %35 = arith.addf %27, %34 : vector<8x256xf32>
    %36 = vector.extract_strided_slice %1 {offsets = [0, 4], sizes = [8, 256], strides = [1, 1]} : vector<8x324xf32> to vector<8x256xf32>
    %37 = vector.extract_strided_slice %3 {offsets = [4, 0], sizes = [1, 256], strides = [1, 1]} : vector<5x256xf32> to vector<1x256xf32>
    %38 = vector.broadcast %37 : vector<1x256xf32> to vector<8x256xf32>
    %39 = arith.mulf %36, %38 : vector<8x256xf32>
    %40 = vector.extract_strided_slice %2 {offsets = [0, 4], sizes = [8, 1], strides = [1, 1]} : vector<8x25xf32> to vector<8x1xf32>
    %41 = vector.broadcast %40 : vector<8x1xf32> to vector<8x256xf32>
    %42 = arith.mulf %41, %39 : vector<8x256xf32>
    %43 = arith.addf %35, %42 : vector<8x256xf32>
    %44 = vector.extract_strided_slice %1 {offsets = [0, 16], sizes = [8, 256], strides = [1, 1]} : vector<8x324xf32> to vector<8x256xf32>
    %45 = vector.extract_strided_slice %3 {offsets = [0, 0], sizes = [1, 256], strides = [1, 1]} : vector<5x256xf32> to vector<1x256xf32>
    %46 = vector.broadcast %45 : vector<1x256xf32> to vector<8x256xf32>
    %47 = arith.mulf %44, %46 : vector<8x256xf32>
    %48 = vector.extract_strided_slice %2 {offsets = [0, 5], sizes = [8, 1], strides = [1, 1]} : vector<8x25xf32> to vector<8x1xf32>
    %49 = vector.broadcast %48 : vector<8x1xf32> to vector<8x256xf32>
    %50 = arith.mulf %49, %47 : vector<8x256xf32>
    %51 = arith.addf %43, %50 : vector<8x256xf32>
    %52 = vector.extract_strided_slice %1 {offsets = [0, 17], sizes = [8, 256], strides = [1, 1]} : vector<8x324xf32> to vector<8x256xf32>
    %53 = vector.extract_strided_slice %3 {offsets = [1, 0], sizes = [1, 256], strides = [1, 1]} : vector<5x256xf32> to vector<1x256xf32>
    %54 = vector.broadcast %53 : vector<1x256xf32> to vector<8x256xf32>
    %55 = arith.mulf %52, %54 : vector<8x256xf32>
    %56 = vector.extract_strided_slice %2 {offsets = [0, 6], sizes = [8, 1], strides = [1, 1]} : vector<8x25xf32> to vector<8x1xf32>
    %57 = vector.broadcast %56 : vector<8x1xf32> to vector<8x256xf32>
    %58 = arith.mulf %57, %55 : vector<8x256xf32>
    %59 = arith.addf %51, %58 : vector<8x256xf32>
    %60 = vector.extract_strided_slice %1 {offsets = [0, 18], sizes = [8, 256], strides = [1, 1]} : vector<8x324xf32> to vector<8x256xf32>
    %61 = vector.extract_strided_slice %2 {offsets = [0, 7], sizes = [8, 1], strides = [1, 1]} : vector<8x25xf32> to vector<8x1xf32>
    %62 = vector.broadcast %61 : vector<8x1xf32> to vector<8x256xf32>
    %63 = arith.mulf %62, %60 : vector<8x256xf32>
    %64 = arith.addf %59, %63 : vector<8x256xf32>
    %65 = vector.extract_strided_slice %1 {offsets = [0, 19], sizes = [8, 256], strides = [1, 1]} : vector<8x324xf32> to vector<8x256xf32>
    %66 = vector.extract_strided_slice %3 {offsets = [3, 0], sizes = [1, 256], strides = [1, 1]} : vector<5x256xf32> to vector<1x256xf32>
    %67 = vector.broadcast %66 : vector<1x256xf32> to vector<8x256xf32>
    %68 = arith.mulf %65, %67 : vector<8x256xf32>
    %69 = vector.extract_strided_slice %2 {offsets = [0, 8], sizes = [8, 1], strides = [1, 1]} : vector<8x25xf32> to vector<8x1xf32>
    %70 = vector.broadcast %69 : vector<8x1xf32> to vector<8x256xf32>
    %71 = arith.mulf %70, %68 : vector<8x256xf32>
    %72 = arith.addf %64, %71 : vector<8x256xf32>
    %73 = vector.extract_strided_slice %1 {offsets = [0, 20], sizes = [8, 256], strides = [1, 1]} : vector<8x324xf32> to vector<8x256xf32>
    %74 = vector.extract_strided_slice %3 {offsets = [4, 0], sizes = [1, 256], strides = [1, 1]} : vector<5x256xf32> to vector<1x256xf32>
    %75 = vector.broadcast %74 : vector<1x256xf32> to vector<8x256xf32>
    %76 = arith.mulf %73, %75 : vector<8x256xf32>
    %77 = vector.extract_strided_slice %2 {offsets = [0, 9], sizes = [8, 1], strides = [1, 1]} : vector<8x25xf32> to vector<8x1xf32>
    %78 = vector.broadcast %77 : vector<8x1xf32> to vector<8x256xf32>
    %79 = arith.mulf %78, %76 : vector<8x256xf32>
    %80 = arith.addf %72, %79 : vector<8x256xf32>
    %81 = vector.extract_strided_slice %1 {offsets = [0, 32], sizes = [8, 256], strides = [1, 1]} : vector<8x324xf32> to vector<8x256xf32>
    %82 = vector.extract_strided_slice %3 {offsets = [0, 0], sizes = [1, 256], strides = [1, 1]} : vector<5x256xf32> to vector<1x256xf32>
    %83 = vector.broadcast %82 : vector<1x256xf32> to vector<8x256xf32>
    %84 = arith.mulf %81, %83 : vector<8x256xf32>
    %85 = vector.extract_strided_slice %2 {offsets = [0, 10], sizes = [8, 1], strides = [1, 1]} : vector<8x25xf32> to vector<8x1xf32>
    %86 = vector.broadcast %85 : vector<8x1xf32> to vector<8x256xf32>
    %87 = arith.mulf %86, %84 : vector<8x256xf32>
    %88 = arith.addf %80, %87 : vector<8x256xf32>
    %89 = vector.extract_strided_slice %1 {offsets = [0, 33], sizes = [8, 256], strides = [1, 1]} : vector<8x324xf32> to vector<8x256xf32>
    %90 = vector.extract_strided_slice %3 {offsets = [1, 0], sizes = [1, 256], strides = [1, 1]} : vector<5x256xf32> to vector<1x256xf32>
    %91 = vector.broadcast %90 : vector<1x256xf32> to vector<8x256xf32>
    %92 = arith.mulf %89, %91 : vector<8x256xf32>
    %93 = vector.extract_strided_slice %2 {offsets = [0, 11], sizes = [8, 1], strides = [1, 1]} : vector<8x25xf32> to vector<8x1xf32>
    %94 = vector.broadcast %93 : vector<8x1xf32> to vector<8x256xf32>
    %95 = arith.mulf %94, %92 : vector<8x256xf32>
    %96 = arith.addf %88, %95 : vector<8x256xf32>
    %97 = vector.extract_strided_slice %1 {offsets = [0, 34], sizes = [8, 256], strides = [1, 1]} : vector<8x324xf32> to vector<8x256xf32>
    %98 = vector.extract_strided_slice %2 {offsets = [0, 12], sizes = [8, 1], strides = [1, 1]} : vector<8x25xf32> to vector<8x1xf32>
    %99 = vector.broadcast %98 : vector<8x1xf32> to vector<8x256xf32>
    %100 = arith.mulf %99, %97 : vector<8x256xf32>
    %101 = arith.addf %96, %100 : vector<8x256xf32>
    %102 = vector.extract_strided_slice %1 {offsets = [0, 35], sizes = [8, 256], strides = [1, 1]} : vector<8x324xf32> to vector<8x256xf32>
    %103 = vector.extract_strided_slice %3 {offsets = [3, 0], sizes = [1, 256], strides = [1, 1]} : vector<5x256xf32> to vector<1x256xf32>
    %104 = vector.broadcast %103 : vector<1x256xf32> to vector<8x256xf32>
    %105 = arith.mulf %102, %104 : vector<8x256xf32>
    %106 = vector.extract_strided_slice %2 {offsets = [0, 13], sizes = [8, 1], strides = [1, 1]} : vector<8x25xf32> to vector<8x1xf32>
    %107 = vector.broadcast %106 : vector<8x1xf32> to vector<8x256xf32>
    %108 = arith.mulf %107, %105 : vector<8x256xf32>
    %109 = arith.addf %101, %108 : vector<8x256xf32>
    %110 = vector.extract_strided_slice %1 {offsets = [0, 36], sizes = [8, 256], strides = [1, 1]} : vector<8x324xf32> to vector<8x256xf32>
    %111 = vector.extract_strided_slice %3 {offsets = [4, 0], sizes = [1, 256], strides = [1, 1]} : vector<5x256xf32> to vector<1x256xf32>
    %112 = vector.broadcast %111 : vector<1x256xf32> to vector<8x256xf32>
    %113 = arith.mulf %110, %112 : vector<8x256xf32>
    %114 = vector.extract_strided_slice %2 {offsets = [0, 14], sizes = [8, 1], strides = [1, 1]} : vector<8x25xf32> to vector<8x1xf32>
    %115 = vector.broadcast %114 : vector<8x1xf32> to vector<8x256xf32>
    %116 = arith.mulf %115, %113 : vector<8x256xf32>
    %117 = arith.addf %109, %116 : vector<8x256xf32>
    %118 = vector.extract_strided_slice %1 {offsets = [0, 48], sizes = [8, 256], strides = [1, 1]} : vector<8x324xf32> to vector<8x256xf32>
    %119 = vector.extract_strided_slice %3 {offsets = [0, 0], sizes = [1, 256], strides = [1, 1]} : vector<5x256xf32> to vector<1x256xf32>
    %120 = vector.broadcast %119 : vector<1x256xf32> to vector<8x256xf32>
    %121 = arith.mulf %118, %120 : vector<8x256xf32>
    %122 = vector.extract_strided_slice %2 {offsets = [0, 15], sizes = [8, 1], strides = [1, 1]} : vector<8x25xf32> to vector<8x1xf32>
    %123 = vector.broadcast %122 : vector<8x1xf32> to vector<8x256xf32>
    %124 = arith.mulf %123, %121 : vector<8x256xf32>
    %125 = arith.addf %117, %124 : vector<8x256xf32>
    %126 = vector.extract_strided_slice %1 {offsets = [0, 49], sizes = [8, 256], strides = [1, 1]} : vector<8x324xf32> to vector<8x256xf32>
    %127 = vector.extract_strided_slice %3 {offsets = [1, 0], sizes = [1, 256], strides = [1, 1]} : vector<5x256xf32> to vector<1x256xf32>
    %128 = vector.broadcast %127 : vector<1x256xf32> to vector<8x256xf32>
    %129 = arith.mulf %126, %128 : vector<8x256xf32>
    %130 = vector.extract_strided_slice %2 {offsets = [0, 16], sizes = [8, 1], strides = [1, 1]} : vector<8x25xf32> to vector<8x1xf32>
    %131 = vector.broadcast %130 : vector<8x1xf32> to vector<8x256xf32>
    %132 = arith.mulf %131, %129 : vector<8x256xf32>
    %133 = arith.addf %125, %132 : vector<8x256xf32>
    %134 = vector.extract_strided_slice %1 {offsets = [0, 50], sizes = [8, 256], strides = [1, 1]} : vector<8x324xf32> to vector<8x256xf32>
    %135 = vector.extract_strided_slice %2 {offsets = [0, 17], sizes = [8, 1], strides = [1, 1]} : vector<8x25xf32> to vector<8x1xf32>
    %136 = vector.broadcast %135 : vector<8x1xf32> to vector<8x256xf32>
    %137 = arith.mulf %136, %134 : vector<8x256xf32>
    %138 = arith.addf %133, %137 : vector<8x256xf32>
    %139 = vector.extract_strided_slice %1 {offsets = [0, 51], sizes = [8, 256], strides = [1, 1]} : vector<8x324xf32> to vector<8x256xf32>
    %140 = vector.extract_strided_slice %3 {offsets = [3, 0], sizes = [1, 256], strides = [1, 1]} : vector<5x256xf32> to vector<1x256xf32>
    %141 = vector.broadcast %140 : vector<1x256xf32> to vector<8x256xf32>
    %142 = arith.mulf %139, %141 : vector<8x256xf32>
    %143 = vector.extract_strided_slice %2 {offsets = [0, 18], sizes = [8, 1], strides = [1, 1]} : vector<8x25xf32> to vector<8x1xf32>
    %144 = vector.broadcast %143 : vector<8x1xf32> to vector<8x256xf32>
    %145 = arith.mulf %144, %142 : vector<8x256xf32>
    %146 = arith.addf %138, %145 : vector<8x256xf32>
    %147 = vector.extract_strided_slice %1 {offsets = [0, 52], sizes = [8, 256], strides = [1, 1]} : vector<8x324xf32> to vector<8x256xf32>
    %148 = vector.extract_strided_slice %3 {offsets = [4, 0], sizes = [1, 256], strides = [1, 1]} : vector<5x256xf32> to vector<1x256xf32>
    %149 = vector.broadcast %148 : vector<1x256xf32> to vector<8x256xf32>
    %150 = arith.mulf %147, %149 : vector<8x256xf32>
    %151 = vector.extract_strided_slice %2 {offsets = [0, 19], sizes = [8, 1], strides = [1, 1]} : vector<8x25xf32> to vector<8x1xf32>
    %152 = vector.broadcast %151 : vector<8x1xf32> to vector<8x256xf32>
    %153 = arith.mulf %152, %150 : vector<8x256xf32>
    %154 = arith.addf %146, %153 : vector<8x256xf32>
    %155 = vector.extract_strided_slice %1 {offsets = [0, 64], sizes = [8, 256], strides = [1, 1]} : vector<8x324xf32> to vector<8x256xf32>
    %156 = vector.extract_strided_slice %3 {offsets = [0, 0], sizes = [1, 256], strides = [1, 1]} : vector<5x256xf32> to vector<1x256xf32>
    %157 = vector.broadcast %156 : vector<1x256xf32> to vector<8x256xf32>
    %158 = arith.mulf %155, %157 : vector<8x256xf32>
    %159 = vector.extract_strided_slice %2 {offsets = [0, 20], sizes = [8, 1], strides = [1, 1]} : vector<8x25xf32> to vector<8x1xf32>
    %160 = vector.broadcast %159 : vector<8x1xf32> to vector<8x256xf32>
    %161 = arith.mulf %160, %158 : vector<8x256xf32>
    %162 = arith.addf %154, %161 : vector<8x256xf32>
    %163 = vector.extract_strided_slice %1 {offsets = [0, 65], sizes = [8, 256], strides = [1, 1]} : vector<8x324xf32> to vector<8x256xf32>
    %164 = vector.extract_strided_slice %3 {offsets = [1, 0], sizes = [1, 256], strides = [1, 1]} : vector<5x256xf32> to vector<1x256xf32>
    %165 = vector.broadcast %164 : vector<1x256xf32> to vector<8x256xf32>
    %166 = arith.mulf %163, %165 : vector<8x256xf32>
    %167 = vector.extract_strided_slice %2 {offsets = [0, 21], sizes = [8, 1], strides = [1, 1]} : vector<8x25xf32> to vector<8x1xf32>
    %168 = vector.broadcast %167 : vector<8x1xf32> to vector<8x256xf32>
    %169 = arith.mulf %168, %166 : vector<8x256xf32>
    %170 = arith.addf %162, %169 : vector<8x256xf32>
    %171 = vector.extract_strided_slice %1 {offsets = [0, 66], sizes = [8, 256], strides = [1, 1]} : vector<8x324xf32> to vector<8x256xf32>
    %172 = vector.extract_strided_slice %2 {offsets = [0, 22], sizes = [8, 1], strides = [1, 1]} : vector<8x25xf32> to vector<8x1xf32>
    %173 = vector.broadcast %172 : vector<8x1xf32> to vector<8x256xf32>
    %174 = arith.mulf %173, %171 : vector<8x256xf32>
    %175 = arith.addf %170, %174 : vector<8x256xf32>
    %176 = vector.extract_strided_slice %1 {offsets = [0, 67], sizes = [8, 256], strides = [1, 1]} : vector<8x324xf32> to vector<8x256xf32>
    %177 = vector.extract_strided_slice %3 {offsets = [3, 0], sizes = [1, 256], strides = [1, 1]} : vector<5x256xf32> to vector<1x256xf32>
    %178 = vector.broadcast %177 : vector<1x256xf32> to vector<8x256xf32>
    %179 = arith.mulf %176, %178 : vector<8x256xf32>
    %180 = vector.extract_strided_slice %2 {offsets = [0, 23], sizes = [8, 1], strides = [1, 1]} : vector<8x25xf32> to vector<8x1xf32>
    %181 = vector.broadcast %180 : vector<8x1xf32> to vector<8x256xf32>
    %182 = arith.mulf %181, %179 : vector<8x256xf32>
    %183 = arith.addf %175, %182 : vector<8x256xf32>
    %184 = vector.extract_strided_slice %1 {offsets = [0, 68], sizes = [8, 256], strides = [1, 1]} : vector<8x324xf32> to vector<8x256xf32>
    %185 = vector.extract_strided_slice %3 {offsets = [4, 0], sizes = [1, 256], strides = [1, 1]} : vector<5x256xf32> to vector<1x256xf32>
    %186 = vector.broadcast %185 : vector<1x256xf32> to vector<8x256xf32>
    %187 = arith.mulf %184, %186 : vector<8x256xf32>
    %188 = vector.extract_strided_slice %2 {offsets = [0, 24], sizes = [8, 1], strides = [1, 1]} : vector<8x25xf32> to vector<8x1xf32>
    %189 = vector.broadcast %188 : vector<8x1xf32> to vector<8x256xf32>
    %190 = arith.mulf %189, %187 : vector<8x256xf32>
    %191 = arith.addf %183, %190 : vector<8x256xf32>
    %cst = arith.constant dense<0.000000e+00> : vector<8xf32>
    %192 = vector.multi_reduction <add>, %191, %cst [1] : vector<8x256xf32> to vector<8xf32>
    %193 = vector.shape_cast %192 : vector<8xf32> to vector<8x1xf32>
    %cst_8 = arith.constant 2.560000e+02 : f32
    %194 = vector.broadcast %cst_8 : f32 to vector<8x1xf32>
    %195 = arith.divf %193, %194 : vector<8x1xf32>
    %196 = vector.broadcast %195 : vector<8x1xf32> to vector<8x256xf32>
    %197 = arith.subf %191, %196 : vector<8x256xf32>
    %198 = arith.mulf %197, %197 : vector<8x256xf32>
    %cst_9 = arith.constant dense<0.000000e+00> : vector<8xf32>
    %199 = vector.multi_reduction <add>, %198, %cst_9 [1] : vector<8x256xf32> to vector<8xf32>
    %200 = vector.shape_cast %199 : vector<8xf32> to vector<8x1xf32>
    %cst_10 = arith.constant 2.560000e+02 : f32
    %201 = vector.broadcast %cst_10 : f32 to vector<8x1xf32>
    %202 = arith.divf %200, %201 : vector<8x1xf32>
    %203 = vector.broadcast %195 : vector<8x1xf32> to vector<8x256xf32>
    %204 = arith.subf %191, %203 : vector<8x256xf32>
    %cst_11 = arith.constant 9.99999974E-6 : f32
    %205 = vector.broadcast %cst_11 : f32 to vector<8x1xf32>
    %206 = arith.addf %202, %205 : vector<8x1xf32>
    %207 = math.rsqrt %206 : vector<8x1xf32>
    %208 = vector.broadcast %207 : vector<8x1xf32> to vector<8x256xf32>
    %209 = arith.mulf %204, %208 : vector<8x256xf32>
    %cst_12 = arith.constant 0.707106769 : f32
    %210 = vector.broadcast %cst_12 : f32 to vector<8x256xf32>
    %211 = arith.mulf %209, %210 : vector<8x256xf32>
    %212 = math.absf %211 : vector<8x256xf32>
    %cst_13 = arith.constant 0.327591091 : f32
    %213 = vector.broadcast %cst_13 : f32 to vector<8x256xf32>
    %214 = arith.mulf %213, %212 : vector<8x256xf32>
    %cst_14 = arith.constant 1.000000e+00 : f32
    %215 = vector.broadcast %cst_14 : f32 to vector<8x256xf32>
    %216 = arith.addf %215, %214 : vector<8x256xf32>
    %cst_15 = arith.constant 1.000000e+00 : f32
    %217 = vector.broadcast %cst_15 : f32 to vector<8x256xf32>
    %218 = arith.divf %217, %216 : vector<8x256xf32>
    %cst_16 = arith.constant 1.06140542 : f32
    %219 = vector.broadcast %cst_16 : f32 to vector<8x256xf32>
    %220 = arith.mulf %218, %219 : vector<8x256xf32>
    %cst_17 = arith.constant -1.45315206 : f32
    %221 = vector.broadcast %cst_17 : f32 to vector<8x256xf32>
    %222 = arith.addf %221, %220 : vector<8x256xf32>
    %223 = arith.mulf %218, %222 : vector<8x256xf32>
    %cst_18 = arith.constant 1.42141378 : f32
    %224 = vector.broadcast %cst_18 : f32 to vector<8x256xf32>
    %225 = arith.addf %224, %223 : vector<8x256xf32>
    %226 = arith.mulf %218, %225 : vector<8x256xf32>
    %cst_19 = arith.constant -0.284496725 : f32
    %227 = vector.broadcast %cst_19 : f32 to vector<8x256xf32>
    %228 = arith.addf %227, %226 : vector<8x256xf32>
    %229 = arith.mulf %218, %228 : vector<8x256xf32>
    %cst_20 = arith.constant 0.254829586 : f32
    %230 = vector.broadcast %cst_20 : f32 to vector<8x256xf32>
    %231 = arith.addf %230, %229 : vector<8x256xf32>
    %232 = arith.mulf %218, %231 : vector<8x256xf32>
    %cst_21 = arith.constant 0.000000e+00 : f32
    %233 = vector.broadcast %cst_21 : f32 to vector<8x256xf32>
    %234 = arith.subf %233, %212 : vector<8x256xf32>
    %235 = arith.mulf %234, %212 : vector<8x256xf32>
    %236 = math.exp %235 : vector<8x256xf32>
    %237 = arith.mulf %232, %236 : vector<8x256xf32>
    %cst_22 = arith.constant 1.000000e+00 : f32
    %238 = vector.broadcast %cst_22 : f32 to vector<8x256xf32>
    %239 = arith.subf %238, %237 : vector<8x256xf32>
    %cst_23 = arith.constant 0.000000e+00 : f32
    %240 = vector.broadcast %cst_23 : f32 to vector<8x256xf32>
    %241 = arith.cmpf oge, %211, %240 : vector<8x256xf32>
    %cst_24 = arith.constant 0.000000e+00 : f32
    %242 = vector.broadcast %cst_24 : f32 to vector<8x256xf32>
    %243 = arith.subf %242, %239 : vector<8x256xf32>
    %244 = arith.select %241, %239, %243 : vector<8x256xi1>, vector<8x256xf32>
    %cst_25 = arith.constant 5.000000e-01 : f32
    %245 = vector.broadcast %cst_25 : f32 to vector<8x256xf32>
    %246 = arith.mulf %245, %209 : vector<8x256xf32>
    %cst_26 = arith.constant 1.000000e+00 : f32
    %247 = vector.broadcast %cst_26 : f32 to vector<8x256xf32>
    %248 = arith.addf %247, %244 : vector<8x256xf32>
    %249 = arith.mulf %246, %248 : vector<8x256xf32>
    %c0_27 = arith.constant 0 : index
    %c0_28 = arith.constant 0 : index
    %250 = vector.load %arg10[%c0_27, %c0_28] : memref<4x8xf32, #tpu.memory_space<vmem>>, vector<4x8xf32>
    %cst_29 = arith.constant dense<0.000000e+00> : vector<4x256xf32>
    %251 = tpu.matmul %250, %249, %cst_29 {dimension_numbers = #tpu.dot_dimension_numbers<[1], [0], [0], [1], [0, 0, 1, 1], [], []>} : vector<4x8xf32>, vector<8x256xf32>, vector<4x256xf32> -> vector<4x256xf32>
    %c0_30 = arith.constant 0 : index
    %c0_31 = arith.constant 0 : index
    %252 = vector.load %arg5[%c0_30, %c0_31] : memref<2x256xf32, #tpu.memory_space<vmem>>, vector<1x256xf32>
    %c1 = arith.constant 1 : index
    %c0_32 = arith.constant 0 : index
    %253 = vector.load %arg5[%c1, %c0_32] : memref<2x256xf32, #tpu.memory_space<vmem>>, vector<1x256xf32>
    %254 = tpu.iota {dimensions = array<i32: 0>} : vector<16x256xi32>
    %255 = tpu.iota {dimensions = array<i32: 0>} : vector<16x256xi32>
    %c0_33 = arith.constant 0 : index
    %c0_34 = arith.constant 0 : index
    %256 = vector.load %arg6[%c0_33, %c0_34] : memref<64x16xf32, #tpu.memory_space<vmem>>, vector<64x16xf32>
    %c0_35 = arith.constant 0 : index
    %c0_36 = arith.constant 0 : index
    %257 = vector.load %arg7[%c0_35, %c0_36] : memref<4x64xf32, #tpu.memory_space<vmem>>, vector<4x64xf32>
    %c0_37 = arith.constant 0 : index
    %c0_38 = arith.constant 0 : index
    %c0_39 = arith.constant 0 : index
    %258 = vector.load %arg2[%c0_37, %c0_38, %c0_39] : memref<1x64x16xf32, #tpu.memory_space<vmem>>, vector<1x64x16xf32>
    %259 = vector.shape_cast %258 : vector<1x64x16xf32> to vector<64x16xf32>
    %260 = vector.extract_strided_slice %251 {offsets = [0, 0], sizes = [1, 256], strides = [1, 1]} : vector<4x256xf32> to vector<1x256xf32>
    %261 = vector.extract_strided_slice %251 {offsets = [1, 0], sizes = [1, 256], strides = [1, 1]} : vector<4x256xf32> to vector<1x256xf32>
    %cst_40 = arith.constant 6.250000e-02 : f32
    %262 = vector.broadcast %cst_40 : f32 to vector<1x256xf32>
    %263 = arith.mulf %260, %262 : vector<1x256xf32>
    %264 = arith.addf %252, %263 : vector<1x256xf32>
    %cst_41 = arith.constant 1.000000e+00 : f32
    %265 = vector.broadcast %cst_41 : f32 to vector<1x256xf32>
    %266 = arith.addf %264, %265 : vector<1x256xf32>
    %cst_42 = arith.constant 7.500000e+00 : f32
    %267 = vector.broadcast %cst_42 : f32 to vector<1x256xf32>
    %268 = arith.mulf %266, %267 : vector<1x256xf32>
    %cst_43 = arith.constant 6.250000e-02 : f32
    %269 = vector.broadcast %cst_43 : f32 to vector<1x256xf32>
    %270 = arith.mulf %261, %269 : vector<1x256xf32>
    %271 = arith.addf %253, %270 : vector<1x256xf32>
    %cst_44 = arith.constant 1.000000e+00 : f32
    %272 = vector.broadcast %cst_44 : f32 to vector<1x256xf32>
    %273 = arith.addf %271, %272 : vector<1x256xf32>
    %cst_45 = arith.constant 7.500000e+00 : f32
    %274 = vector.broadcast %cst_45 : f32 to vector<1x256xf32>
    %275 = arith.mulf %273, %274 : vector<1x256xf32>
    %276 = math.floor %268 : vector<1x256xf32>
    %277 = arith.fptosi %276 : vector<1x256xf32> to vector<1x256xi32>
    %278 = arith.subf %268, %276 : vector<1x256xf32>
    %279 = vector.broadcast %277 : vector<1x256xi32> to vector<16x256xi32>
    %280 = arith.cmpi eq, %254, %279 : vector<16x256xi32>
    %cst_46 = arith.constant 1.000000e+00 : f32
    %281 = vector.broadcast %cst_46 : f32 to vector<1x256xf32>
    %282 = arith.subf %281, %278 : vector<1x256xf32>
    %cst_47 = arith.constant 0.000000e+00 : f32
    %283 = vector.shape_cast %282 : vector<1x256xf32> to vector<1x256xf32>
    %284 = vector.broadcast %283 : vector<1x256xf32> to vector<16x256xf32>
    %285 = vector.broadcast %cst_47 : f32 to vector<16x256xf32>
    %286 = arith.select %280, %284, %285 : vector<16x256xi1>, vector<16x256xf32>
    %c1_i32 = arith.constant 1 : i32
    %287 = vector.broadcast %c1_i32 : i32 to vector<1x256xi32>
    %288 = arith.addi %277, %287 : vector<1x256xi32>
    %289 = vector.broadcast %288 : vector<1x256xi32> to vector<16x256xi32>
    %290 = arith.cmpi eq, %254, %289 : vector<16x256xi32>
    %cst_48 = arith.constant 0.000000e+00 : f32
    %291 = vector.shape_cast %278 : vector<1x256xf32> to vector<1x256xf32>
    %292 = vector.broadcast %291 : vector<1x256xf32> to vector<16x256xf32>
    %293 = vector.broadcast %cst_48 : f32 to vector<16x256xf32>
    %294 = arith.select %290, %292, %293 : vector<16x256xi1>, vector<16x256xf32>
    %295 = arith.addf %286, %294 : vector<16x256xf32>
    %296 = math.floor %275 : vector<1x256xf32>
    %297 = arith.fptosi %296 : vector<1x256xf32> to vector<1x256xi32>
    %298 = arith.subf %275, %296 : vector<1x256xf32>
    %299 = vector.broadcast %297 : vector<1x256xi32> to vector<16x256xi32>
    %300 = arith.cmpi eq, %255, %299 : vector<16x256xi32>
    %cst_49 = arith.constant 1.000000e+00 : f32
    %301 = vector.broadcast %cst_49 : f32 to vector<1x256xf32>
    %302 = arith.subf %301, %298 : vector<1x256xf32>
    %cst_50 = arith.constant 0.000000e+00 : f32
    %303 = vector.shape_cast %302 : vector<1x256xf32> to vector<1x256xf32>
    %304 = vector.broadcast %303 : vector<1x256xf32> to vector<16x256xf32>
    %305 = vector.broadcast %cst_50 : f32 to vector<16x256xf32>
    %306 = arith.select %300, %304, %305 : vector<16x256xi1>, vector<16x256xf32>
    %c1_i32_51 = arith.constant 1 : i32
    %307 = vector.broadcast %c1_i32_51 : i32 to vector<1x256xi32>
    %308 = arith.addi %297, %307 : vector<1x256xi32>
    %309 = vector.broadcast %308 : vector<1x256xi32> to vector<16x256xi32>
    %310 = arith.cmpi eq, %255, %309 : vector<16x256xi32>
    %cst_52 = arith.constant 0.000000e+00 : f32
    %311 = vector.shape_cast %298 : vector<1x256xf32> to vector<1x256xf32>
    %312 = vector.broadcast %311 : vector<1x256xf32> to vector<16x256xf32>
    %313 = vector.broadcast %cst_52 : f32 to vector<16x256xf32>
    %314 = arith.select %310, %312, %313 : vector<16x256xi1>, vector<16x256xf32>
    %315 = arith.addf %306, %314 : vector<16x256xf32>
    %cst_53 = arith.constant dense<0.000000e+00> : vector<64x256xf32>
    %316 = tpu.matmul %259, %295, %cst_53 {dimension_numbers = #tpu.dot_dimension_numbers<[1], [0], [0], [1], [0, 0, 1, 1], [], []>} : vector<64x16xf32>, vector<16x256xf32>, vector<64x256xf32> -> vector<64x256xf32>
    %cst_54 = arith.constant dense<0.000000e+00> : vector<64x256xf32>
    %317 = tpu.matmul %256, %315, %cst_54 {dimension_numbers = #tpu.dot_dimension_numbers<[1], [0], [0], [1], [0, 0, 1, 1], [], []>} : vector<64x16xf32>, vector<16x256xf32>, vector<64x256xf32> -> vector<64x256xf32>
    %318 = arith.mulf %317, %316 : vector<64x256xf32>
    %cst_55 = arith.constant dense<0.000000e+00> : vector<4x256xf32>
    %319 = tpu.matmul %257, %318, %cst_55 {dimension_numbers = #tpu.dot_dimension_numbers<[1], [0], [0], [1], [0, 0, 1, 1], [], []>} : vector<4x64xf32>, vector<64x256xf32>, vector<4x256xf32> -> vector<4x256xf32>
    %c0_56 = arith.constant 0 : index
    %c0_57 = arith.constant 0 : index
    %c0_58 = arith.constant 0 : index
    %320 = vector.load %arg3[%c0_56, %c0_57, %c0_58] : memref<1x64x16xf32, #tpu.memory_space<vmem>>, vector<1x64x16xf32>
    %321 = vector.shape_cast %320 : vector<1x64x16xf32> to vector<64x16xf32>
    %322 = vector.extract_strided_slice %251 {offsets = [2, 0], sizes = [1, 256], strides = [1, 1]} : vector<4x256xf32> to vector<1x256xf32>
    %323 = vector.extract_strided_slice %251 {offsets = [3, 0], sizes = [1, 256], strides = [1, 1]} : vector<4x256xf32> to vector<1x256xf32>
    %cst_59 = arith.constant 6.250000e-02 : f32
    %324 = vector.broadcast %cst_59 : f32 to vector<1x256xf32>
    %325 = arith.mulf %322, %324 : vector<1x256xf32>
    %326 = arith.addf %252, %325 : vector<1x256xf32>
    %cst_60 = arith.constant 1.000000e+00 : f32
    %327 = vector.broadcast %cst_60 : f32 to vector<1x256xf32>
    %328 = arith.addf %326, %327 : vector<1x256xf32>
    %cst_61 = arith.constant 7.500000e+00 : f32
    %329 = vector.broadcast %cst_61 : f32 to vector<1x256xf32>
    %330 = arith.mulf %328, %329 : vector<1x256xf32>
    %cst_62 = arith.constant 6.250000e-02 : f32
    %331 = vector.broadcast %cst_62 : f32 to vector<1x256xf32>
    %332 = arith.mulf %323, %331 : vector<1x256xf32>
    %333 = arith.addf %253, %332 : vector<1x256xf32>
    %cst_63 = arith.constant 1.000000e+00 : f32
    %334 = vector.broadcast %cst_63 : f32 to vector<1x256xf32>
    %335 = arith.addf %333, %334 : vector<1x256xf32>
    %cst_64 = arith.constant 7.500000e+00 : f32
    %336 = vector.broadcast %cst_64 : f32 to vector<1x256xf32>
    %337 = arith.mulf %335, %336 : vector<1x256xf32>
    %338 = math.floor %330 : vector<1x256xf32>
    %339 = arith.fptosi %338 : vector<1x256xf32> to vector<1x256xi32>
    %340 = arith.subf %330, %338 : vector<1x256xf32>
    %341 = vector.broadcast %339 : vector<1x256xi32> to vector<16x256xi32>
    %342 = arith.cmpi eq, %254, %341 : vector<16x256xi32>
    %cst_65 = arith.constant 1.000000e+00 : f32
    %343 = vector.broadcast %cst_65 : f32 to vector<1x256xf32>
    %344 = arith.subf %343, %340 : vector<1x256xf32>
    %cst_66 = arith.constant 0.000000e+00 : f32
    %345 = vector.shape_cast %344 : vector<1x256xf32> to vector<1x256xf32>
    %346 = vector.broadcast %345 : vector<1x256xf32> to vector<16x256xf32>
    %347 = vector.broadcast %cst_66 : f32 to vector<16x256xf32>
    %348 = arith.select %342, %346, %347 : vector<16x256xi1>, vector<16x256xf32>
    %c1_i32_67 = arith.constant 1 : i32
    %349 = vector.broadcast %c1_i32_67 : i32 to vector<1x256xi32>
    %350 = arith.addi %339, %349 : vector<1x256xi32>
    %351 = vector.broadcast %350 : vector<1x256xi32> to vector<16x256xi32>
    %352 = arith.cmpi eq, %254, %351 : vector<16x256xi32>
    %cst_68 = arith.constant 0.000000e+00 : f32
    %353 = vector.shape_cast %340 : vector<1x256xf32> to vector<1x256xf32>
    %354 = vector.broadcast %353 : vector<1x256xf32> to vector<16x256xf32>
    %355 = vector.broadcast %cst_68 : f32 to vector<16x256xf32>
    %356 = arith.select %352, %354, %355 : vector<16x256xi1>, vector<16x256xf32>
    %357 = arith.addf %348, %356 : vector<16x256xf32>
    %358 = math.floor %337 : vector<1x256xf32>
    %359 = arith.fptosi %358 : vector<1x256xf32> to vector<1x256xi32>
    %360 = arith.subf %337, %358 : vector<1x256xf32>
    %361 = vector.broadcast %359 : vector<1x256xi32> to vector<16x256xi32>
    %362 = arith.cmpi eq, %255, %361 : vector<16x256xi32>
    %cst_69 = arith.constant 1.000000e+00 : f32
    %363 = vector.broadcast %cst_69 : f32 to vector<1x256xf32>
    %364 = arith.subf %363, %360 : vector<1x256xf32>
    %cst_70 = arith.constant 0.000000e+00 : f32
    %365 = vector.shape_cast %364 : vector<1x256xf32> to vector<1x256xf32>
    %366 = vector.broadcast %365 : vector<1x256xf32> to vector<16x256xf32>
    %367 = vector.broadcast %cst_70 : f32 to vector<16x256xf32>
    %368 = arith.select %362, %366, %367 : vector<16x256xi1>, vector<16x256xf32>
    %c1_i32_71 = arith.constant 1 : i32
    %369 = vector.broadcast %c1_i32_71 : i32 to vector<1x256xi32>
    %370 = arith.addi %359, %369 : vector<1x256xi32>
    %371 = vector.broadcast %370 : vector<1x256xi32> to vector<16x256xi32>
    %372 = arith.cmpi eq, %255, %371 : vector<16x256xi32>
    %cst_72 = arith.constant 0.000000e+00 : f32
    %373 = vector.shape_cast %360 : vector<1x256xf32> to vector<1x256xf32>
    %374 = vector.broadcast %373 : vector<1x256xf32> to vector<16x256xf32>
    %375 = vector.broadcast %cst_72 : f32 to vector<16x256xf32>
    %376 = arith.select %372, %374, %375 : vector<16x256xi1>, vector<16x256xf32>
    %377 = arith.addf %368, %376 : vector<16x256xf32>
    %cst_73 = arith.constant dense<0.000000e+00> : vector<64x256xf32>
    %378 = tpu.matmul %321, %357, %cst_73 {dimension_numbers = #tpu.dot_dimension_numbers<[1], [0], [0], [1], [0, 0, 1, 1], [], []>} : vector<64x16xf32>, vector<16x256xf32>, vector<64x256xf32> -> vector<64x256xf32>
    %cst_74 = arith.constant dense<0.000000e+00> : vector<64x256xf32>
    %379 = tpu.matmul %256, %377, %cst_74 {dimension_numbers = #tpu.dot_dimension_numbers<[1], [0], [0], [1], [0, 0, 1, 1], [], []>} : vector<64x16xf32>, vector<16x256xf32>, vector<64x256xf32> -> vector<64x256xf32>
    %380 = arith.mulf %379, %378 : vector<64x256xf32>
    %cst_75 = arith.constant dense<0.000000e+00> : vector<4x256xf32>
    %381 = tpu.matmul %257, %380, %cst_75 {dimension_numbers = #tpu.dot_dimension_numbers<[1], [0], [0], [1], [0, 0, 1, 1], [], []>} : vector<4x64xf32>, vector<64x256xf32>, vector<4x256xf32> -> vector<4x256xf32>
    %382 = vector.extract_strided_slice %1 {offsets = [0, 34], sizes = [4, 256], strides = [1, 1]} : vector<8x324xf32> to vector<4x256xf32>
    %383 = vector.extract_strided_slice %1 {offsets = [4, 34], sizes = [4, 256], strides = [1, 1]} : vector<8x324xf32> to vector<4x256xf32>
    %384 = arith.subf %319, %383 : vector<4x256xf32>
    %c0_76 = arith.constant 0 : index
    %c0_77 = arith.constant 0 : index
    %c0_78 = arith.constant 0 : index
    %385 = vector.load %arg11[%c0_76, %c0_77, %c0_78] : memref<1x4x256xf32, #tpu.memory_space<vmem>>, vector<1x4x256xf32>
    %386 = vector.shape_cast %385 : vector<1x4x256xf32> to vector<4x256xf32>
    %387 = vector.shape_cast %384 : vector<4x256xf32> to vector<1x4x256xf32>
    tpu.vector_store %arg11[%c0_76, %c0_77, %c0_78], %387 {strides = array<i32>} : memref<1x4x256xf32, #tpu.memory_space<vmem>>, vector<1x4x256xf32>,
    %388 = arith.subf %381, %382 : vector<4x256xf32>
    %c0_79 = arith.constant 0 : index
    %c0_80 = arith.constant 0 : index
    %c0_81 = arith.constant 0 : index
    %389 = vector.load %arg12[%c0_79, %c0_80, %c0_81] : memref<1x4x256xf32, #tpu.memory_space<vmem>>, vector<1x4x256xf32>
    %390 = vector.shape_cast %389 : vector<1x4x256xf32> to vector<4x256xf32>
    %391 = vector.shape_cast %388 : vector<4x256xf32> to vector<1x4x256xf32>
    tpu.vector_store %arg12[%c0_79, %c0_80, %c0_81], %391 {strides = array<i32>} : memref<1x4x256xf32, #tpu.memory_space<vmem>>, vector<1x4x256xf32>,
    return
  }
  func.func @transform_0(%arg0: i32) -> (i32, i32, i32) {
    %c0_i32 = arith.constant 0 : i32
    %c0_i32_0 = arith.constant 0 : i32
    %c0_i32_1 = arith.constant 0 : i32
    return %arg0, %c0_i32, %c0_i32_0 : i32, i32, i32
  }
  func.func @transform_1(%arg0: i32) -> (i32, i32, i32) {
    %c0_i32 = arith.constant 0 : i32
    %c0_i32_0 = arith.constant 0 : i32
    %c0_i32_1 = arith.constant 0 : i32
    return %arg0, %c0_i32, %c0_i32_0 : i32, i32, i32
  }
  func.func @transform_2(%arg0: i32) -> (i32, i32, i32) {
    %c0_i32 = arith.constant 0 : i32
    %c0_i32_0 = arith.constant 0 : i32
    %c0_i32_1 = arith.constant 0 : i32
    return %arg0, %c0_i32, %c0_i32_0 : i32, i32, i32
  }
  func.func @transform_3(%arg0: i32) -> (i32, i32) {
    %c0_i32 = arith.constant 0 : i32
    %c0_i32_0 = arith.constant 0 : i32
    %c0_i32_1 = arith.constant 0 : i32
    return %c0_i32, %c0_i32_0 : i32, i32
  }
  func.func @transform_4(%arg0: i32) -> (i32, i32) {
    %c0_i32 = arith.constant 0 : i32
    %c0_i32_0 = arith.constant 0 : i32
    %c0_i32_1 = arith.constant 0 : i32
    return %c0_i32, %c0_i32_0 : i32, i32
  }
  func.func @transform_5(%arg0: i32) -> (i32, i32) {
    %c0_i32 = arith.constant 0 : i32
    %c0_i32_0 = arith.constant 0 : i32
    %c0_i32_1 = arith.constant 0 : i32
    return %c0_i32, %c0_i32_0 : i32, i32
  }
  func.func @transform_6(%arg0: i32) -> (i32, i32) {
    %c0_i32 = arith.constant 0 : i32
    %c0_i32_0 = arith.constant 0 : i32
    %c0_i32_1 = arith.constant 0 : i32
    return %c0_i32, %c0_i32_0 : i32, i32
  }
  func.func @transform_7(%arg0: i32) -> (i32, i32) {
    %c0_i32 = arith.constant 0 : i32
    %c0_i32_0 = arith.constant 0 : i32
    %c0_i32_1 = arith.constant 0 : i32
    return %c0_i32, %c0_i32_0 : i32, i32
  }
  func.func @transform_8(%arg0: i32) -> (i32, i32) {
    %c0_i32 = arith.constant 0 : i32
    %c0_i32_0 = arith.constant 0 : i32
    %c0_i32_1 = arith.constant 0 : i32
    return %c0_i32, %c0_i32_0 : i32, i32
  }
  func.func @transform_9(%arg0: i32) -> (i32, i32) {
    %c0_i32 = arith.constant 0 : i32
    %c0_i32_0 = arith.constant 0 : i32
    %c0_i32_1 = arith.constant 0 : i32
    return %c0_i32, %c0_i32_0 : i32, i32
  }
  func.func @transform_10(%arg0: i32) -> (i32, i32, i32) {
    %c0_i32 = arith.constant 0 : i32
    %c0_i32_0 = arith.constant 0 : i32
    %c0_i32_1 = arith.constant 0 : i32
    return %arg0, %c0_i32, %c0_i32_0 : i32, i32, i32
  }
  func.func @transform_11(%arg0: i32) -> (i32, i32, i32) {
    %c0_i32 = arith.constant 0 : i32
    %c0_i32_0 = arith.constant 0 : i32
    %c0_i32_1 = arith.constant 0 : i32
    return %arg0, %c0_i32, %c0_i32_0 : i32, i32, i32
  }
}

</mosaic_0001>

<llo_original>
// kernel: fdaf_forward.1
$region0: #{fdaf_forward.1}
  #allocation0 [shape = 'u32[]', space=smem, size = 0x4, offset = 0x4, fixed_abs, tag = 'smem constant byte address 0x4 - core index']
  #allocation1 [shape = 'u32[144,128]{1,0:T(1,128)}', space=vmem, size = 0x12000, scoped, tag = 'internal scratch']
  %s0 = inlined_call_operand.vmem [shape: f32[2,8,324], index: 0, kind: input, shape index: {}]
  %s1 = inlined_call_operand.vmem [shape: f32[2,64,16], index: 1, kind: input, shape index: {}]
  %s2 = inlined_call_operand.vmem [shape: f32[2,64,16], index: 2, kind: input, shape index: {}]
  %s3 = inlined_call_operand.vmem [shape: f32[5,256], index: 3, kind: input, shape index: {}]
  %s4 = inlined_call_operand.vmem [shape: f32[2,256], index: 4, kind: input, shape index: {}]
  %s5 = inlined_call_operand.vmem [shape: f32[64,16], index: 5, kind: input, shape index: {}]
  %s6 = inlined_call_operand.vmem [shape: f32[4,64], index: 6, kind: input, shape index: {}]
  %s7 = inlined_call_operand.vmem [shape: f32[8,25], index: 7, kind: input, shape index: {}]
  %s8 = inlined_call_operand.vmem [shape: f32[8,1], index: 8, kind: input, shape index: {}]
  %s9 = inlined_call_operand.vmem [shape: f32[4,8], index: 9, kind: input, shape index: {}]
  %s10 = inlined_call_operand.vmem [shape: f32[2,4,256], index: 10, kind: output, shape index: {0}]
  %s11 = inlined_call_operand.vmem [shape: f32[2,4,256], index: 11, kind: output, shape index: {1}]
  %12 = xla_tuple %s10, %s11
  %s13 = sld [smem:[#allocation0]]
  $region81: #{fdaf_forward.1} parent=0
    _
  %s15 = ssub.s32 1, %s13
  %s16 = scalar_select 0, %s15, %s13
  loop: start=0, step=1, limit=4
  $region2: #{fdaf_forward.1} parent=0 // loop_pre_header
    _
  $region3: #{fdaf_forward.1} parent=0 // loop_header
    %s18 = sphi 0, %s22
    %p19 = scmp.ge.s32.totalorder %s18, 4
    %s28 = sphi 0, %s30
    %s31 = sphi 0, %s28
    %s32 = sphi 0, %s31
    %s48 = sphi 0, %s32
    %s54 = sphi 0, %s56
    %s57 = sphi 0, %s54
    %s58 = sphi 0, %s57
    %s74 = sphi 0, %s58
    %s80 = sphi 0, %s82
    %s83 = sphi 0, %s80
    %s84 = sphi 0, %s83
    %s100 = sphi 0, %s84
    %s104 = sphi 0, %s104
    %s106 = sphi 0, %s104
    %s107 = sphi 0, %s106
    %s121 = sphi 0, %s107
    %s125 = sphi 0, %s125
    %s127 = sphi 0, %s125
    %s128 = sphi 0, %s127
    %s142 = sphi 0, %s128
    %s146 = sphi 0, %s146
    %s148 = sphi 0, %s146
    %s149 = sphi 0, %s148
    %s163 = sphi 0, %s149
    %s167 = sphi 0, %s167
    %s169 = sphi 0, %s167
    %s170 = sphi 0, %s169
    %s184 = sphi 0, %s170
    %s188 = sphi 0, %s188
    %s190 = sphi 0, %s188
    %s191 = sphi 0, %s190
    %s205 = sphi 0, %s191
    %s209 = sphi 0, %s209
    %s211 = sphi 0, %s209
    %s212 = sphi 0, %s211
    %s226 = sphi 0, %s212
    %s230 = sphi 0, %s230
    %s232 = sphi 0, %s230
    %s233 = sphi 0, %s232
    %s247 = sphi 0, %s233
    %s253 = sphi 0, %s255
    %s256 = sphi 0, %s253
    %s257 = sphi 0, %s256
    %s273 = sphi 0, %s257
    %s279 = sphi 0, %s281
    %s282 = sphi 0, %s279
    %s283 = sphi 0, %s282
    %s299 = sphi 0, %s283
  $region4: #{fdaf_forward.1} parent=0 // loop_header_branch
    %21 = sbr.rel (%p19) target = $region8
  $region5: #{fdaf_forward.1} parent=0 // loop_body
    %s23 = ssub.s32 %s18, 1
    %s24 = ssub.s32 %s18, 2
    %s25 = sadd.s32 %s18, 1
    %s26 = ssub.s32 %s18, %s25
    %p27 = scmp.eq.s32.totalorder %s26, 0
    %s29 = sadd.s32 %s28, 1
    %s30 = scalar_select %p27, %s28, %s29
    %p33 = pneg %p27
    %p34 = scmp.eq.s32.totalorder %s18, 1
    %p35 = por %p33, %p34
    %p36 = scmp.ne.s32.totalorder %s28, %s31
    %p37 = scmp.eq.s32.totalorder %s18, 0
    %p38 = por %p36, %p37
    %p39 = scmp.ne.s32.totalorder %s28, %s31
    %p40 = scmp.eq.s32.totalorder %s23, 1
    %p41 = por %p39, %p40
    %p42 = scmp.ne.s32.totalorder %s31, %s32
    %p43 = scmp.eq.s32.totalorder %s23, 0
    %p44 = por %p42, %p43
    %p45 = scmp.ne.s32.totalorder %s31, %s32
    %p46 = scmp.eq.s32.totalorder %s24, 1
    %p47 = por %p45, %p46
    %p49 = scmp.ne.s32.totalorder %s32, %s48
    %p50 = scmp.eq.s32.totalorder %s24, 0
    %p51 = por %p49, %p50
    %s52 = ssub.s32 %s18, %s25
    %p53 = scmp.eq.s32.totalorder %s52, 0
    %s55 = sadd.s32 %s54, 1
    %s56 = scalar_select %p53, %s54, %s55
    %p59 = pneg %p53
    %p60 = scmp.eq.s32.totalorder %s18, 1
    %p61 = por %p59, %p60
    %p62 = scmp.ne.s32.totalorder %s54, %s57
    %p63 = scmp.eq.s32.totalorder %s18, 0
    %p64 = por %p62, %p63
    %p65 = scmp.ne.s32.totalorder %s54, %s57
    %p66 = scmp.eq.s32.totalorder %s23, 1
    %p67 = por %p65, %p66
    %p68 = scmp.ne.s32.totalorder %s57, %s58
    %p69 = scmp.eq.s32.totalorder %s23, 0
    %p70 = por %p68, %p69
    %p71 = scmp.ne.s32.totalorder %s57, %s58
    %p72 = scmp.eq.s32.totalorder %s24, 1
    %p73 = por %p71, %p72
    %p75 = scmp.ne.s32.totalorder %s58, %s74
    %p76 = scmp.eq.s32.totalorder %s24, 0
    %p77 = por %p75, %p76
    %s78 = ssub.s32 %s18, %s25
    %p79 = scmp.eq.s32.totalorder %s78, 0
    %s81 = sadd.s32 %s80, 1
    %s82 = scalar_select %p79, %s80, %s81
    %p85 = pneg %p79
    %p86 = scmp.eq.s32.totalorder %s18, 1
    %p87 = por %p85, %p86
    %p88 = scmp.ne.s32.totalorder %s80, %s83
    %p89 = scmp.eq.s32.totalorder %s18, 0
    %p90 = por %p88, %p89
    %p91 = scmp.ne.s32.totalorder %s80, %s83
    %p92 = scmp.eq.s32.totalorder %s23, 1
    %p93 = por %p91, %p92
    %p94 = scmp.ne.s32.totalorder %s83, %s84
    %p95 = scmp.eq.s32.totalorder %s23, 0
    %p96 = por %p94, %p95
    %p97 = scmp.ne.s32.totalorder %s83, %s84
    %p98 = scmp.eq.s32.totalorder %s24, 1
    %p99 = por %p97, %p98
    %p101 = scmp.ne.s32.totalorder %s84, %s100
    %p102 = scmp.eq.s32.totalorder %s24, 0
    %p103 = por %p101, %p102
    %s105 = sadd.s32 %s104, 1
    %p108 = scmp.eq.s32.totalorder %s18, 1
    %p109 = scmp.ne.s32.totalorder %s104, %s106
    %p110 = scmp.eq.s32.totalorder %s18, 0
    %p111 = por %p109, %p110
    %p112 = scmp.ne.s32.totalorder %s104, %s106
    %p113 = scmp.eq.s32.totalorder %s23, 1
    %p114 = por %p112, %p113
    %p115 = scmp.ne.s32.totalorder %s106, %s107
    %p116 = scmp.eq.s32.totalorder %s23, 0
    %p117 = por %p115, %p116
    %p118 = scmp.ne.s32.totalorder %s106, %s107
    %p119 = scmp.eq.s32.totalorder %s24, 1
    %p120 = por %p118, %p119
    %p122 = scmp.ne.s32.totalorder %s107, %s121
    %p123 = scmp.eq.s32.totalorder %s24, 0
    %p124 = por %p122, %p123
    %s126 = sadd.s32 %s125, 1
    %p129 = scmp.eq.s32.totalorder %s18, 1
    %p130 = scmp.ne.s32.totalorder %s125, %s127
    %p131 = scmp.eq.s32.totalorder %s18, 0
    %p132 = por %p130, %p131
    %p133 = scmp.ne.s32.totalorder %s125, %s127
    %p134 = scmp.eq.s32.totalorder %s23, 1
    %p135 = por %p133, %p134
    %p136 = scmp.ne.s32.totalorder %s127, %s128
    %p137 = scmp.eq.s32.totalorder %s23, 0
    %p138 = por %p136, %p137
    %p139 = scmp.ne.s32.totalorder %s127, %s128
    %p140 = scmp.eq.s32.totalorder %s24, 1
    %p141 = por %p139, %p140
    %p143 = scmp.ne.s32.totalorder %s128, %s142
    %p144 = scmp.eq.s32.totalorder %s24, 0
    %p145 = por %p143, %p144
    %s147 = sadd.s32 %s146, 1
    %p150 = scmp.eq.s32.totalorder %s18, 1
    %p151 = scmp.ne.s32.totalorder %s146, %s148
    %p152 = scmp.eq.s32.totalorder %s18, 0
    %p153 = por %p151, %p152
    %p154 = scmp.ne.s32.totalorder %s146, %s148
    %p155 = scmp.eq.s32.totalorder %s23, 1
    %p156 = por %p154, %p155
    %p157 = scmp.ne.s32.totalorder %s148, %s149
    %p158 = scmp.eq.s32.totalorder %s23, 0
    %p159 = por %p157, %p158
    %p160 = scmp.ne.s32.totalorder %s148, %s149
    %p161 = scmp.eq.s32.totalorder %s24, 1
    %p162 = por %p160, %p161
    %p164 = scmp.ne.s32.totalorder %s149, %s163
    %p165 = scmp.eq.s32.totalorder %s24, 0
    %p166 = por %p164, %p165
    %s168 = sadd.s32 %s167, 1
    %p171 = scmp.eq.s32.totalorder %s18, 1
    %p172 = scmp.ne.s32.totalorder %s167, %s169
    %p173 = scmp.eq.s32.totalorder %s18, 0
    %p174 = por %p172, %p173
    %p175 = scmp.ne.s32.totalorder %s167, %s169
    %p176 = scmp.eq.s32.totalorder %s23, 1
    %p177 = por %p175, %p176
    %p178 = scmp.ne.s32.totalorder %s169, %s170
    %p179 = scmp.eq.s32.totalorder %s23, 0
    %p180 = por %p178, %p179
    %p181 = scmp.ne.s32.totalorder %s169, %s170
    %p182 = scmp.eq.s32.totalorder %s24, 1
    %p183 = por %p181, %p182
    %p185 = scmp.ne.s32.totalorder %s170, %s184
    %p186 = scmp.eq.s32.totalorder %s24, 0
    %p187 = por %p185, %p186
    %s189 = sadd.s32 %s188, 1
    %p192 = scmp.eq.s32.totalorder %s18, 1
    %p193 = scmp.ne.s32.totalorder %s188, %s190
    %p194 = scmp.eq.s32.totalorder %s18, 0
    %p195 = por %p193, %p194
    %p196 = scmp.ne.s32.totalorder %s188, %s190
    %p197 = scmp.eq.s32.totalorder %s23, 1
    %p198 = por %p196, %p197
    %p199 = scmp.ne.s32.totalorder %s190, %s191
    %p200 = scmp.eq.s32.totalorder %s23, 0
    %p201 = por %p199, %p200
    %p202 = scmp.ne.s32.totalorder %s190, %s191
    %p203 = scmp.eq.s32.totalorder %s24, 1
    %p204 = por %p202, %p203
    %p206 = scmp.ne.s32.totalorder %s191, %s205
    %p207 = scmp.eq.s32.totalorder %s24, 0
    %p208 = por %p206, %p207
    %s210 = sadd.s32 %s209, 1
    %p213 = scmp.eq.s32.totalorder %s18, 1
    %p214 = scmp.ne.s32.totalorder %s209, %s211
    %p215 = scmp.eq.s32.totalorder %s18, 0
    %p216 = por %p214, %p215
    %p217 = scmp.ne.s32.totalorder %s209, %s211
    %p218 = scmp.eq.s32.totalorder %s23, 1
    %p219 = por %p217, %p218
    %p220 = scmp.ne.s32.totalorder %s211, %s212
    %p221 = scmp.eq.s32.totalorder %s23, 0
    %p222 = por %p220, %p221
    %p223 = scmp.ne.s32.totalorder %s211, %s212
    %p224 = scmp.eq.s32.totalorder %s24, 1
    %p225 = por %p223, %p224
    %p227 = scmp.ne.s32.totalorder %s212, %s226
    %p228 = scmp.eq.s32.totalorder %s24, 0
    %p229 = por %p227, %p228
    %s231 = sadd.s32 %s230, 1
    %p234 = scmp.eq.s32.totalorder %s18, 1
    %p235 = scmp.ne.s32.totalorder %s230, %s232
    %p236 = scmp.eq.s32.totalorder %s18, 0
    %p237 = por %p235, %p236
    %p238 = scmp.ne.s32.totalorder %s230, %s232
    %p239 = scmp.eq.s32.totalorder %s23, 1
    %p240 = por %p238, %p239
    %p241 = scmp.ne.s32.totalorder %s232, %s233
    %p242 = scmp.eq.s32.totalorder %s23, 0
    %p243 = por %p241, %p242
    %p244 = scmp.ne.s32.totalorder %s232, %s233
    %p245 = scmp.eq.s32.totalorder %s24, 1
    %p246 = por %p244, %p245
    %p248 = scmp.ne.s32.totalorder %s233, %s247
    %p249 = scmp.eq.s32.totalorder %s24, 0
    %p250 = por %p248, %p249
    %s251 = ssub.s32 %s18, %s25
    %p252 = scmp.eq.s32.totalorder %s251, 0
    %s254 = sadd.s32 %s253, 1
    %s255 = scalar_select %p252, %s253, %s254
    %p258 = pneg %p252
    %p259 = scmp.eq.s32.totalorder %s18, 1
    %p260 = por %p258, %p259
    %p261 = scmp.ne.s32.totalorder %s253, %s256
    %p262 = scmp.eq.s32.totalorder %s18, 0
    %p263 = por %p261, %p262
    %p264 = scmp.ne.s32.totalorder %s253, %s256
    %p265 = scmp.eq.s32.totalorder %s23, 1
    %p266 = por %p264, %p265
    %p267 = scmp.ne.s32.totalorder %s256, %s257
    %p268 = scmp.eq.s32.totalorder %s23, 0
    %p269 = por %p267, %p268
    %p270 = scmp.ne.s32.totalorder %s256, %s257
    %p271 = scmp.eq.s32.totalorder %s24, 1
    %p272 = por %p270, %p271
    %p274 = scmp.ne.s32.totalorder %s257, %s273
    %p275 = scmp.eq.s32.totalorder %s24, 0
    %p276 = por %p274, %p275
    %s277 = ssub.s32 %s18, %s25
    %p278 = scmp.eq.s32.totalorder %s277, 0
    %s280 = sadd.s32 %s279, 1
    %s281 = scalar_select %p278, %s279, %s280
    %p284 = pneg %p278
    %p285 = scmp.eq.s32.totalorder %s18, 1
    %p286 = por %p284, %p285
    %p287 = scmp.ne.s32.totalorder %s279, %s282
    %p288 = scmp.eq.s32.totalorder %s18, 0
    %p289 = por %p287, %p288
    %p290 = scmp.ne.s32.totalorder %s279, %s282
    %p291 = scmp.eq.s32.totalorder %s23, 1
    %p292 = por %p290, %p291
    %p293 = scmp.ne.s32.totalorder %s282, %s283
    %p294 = scmp.eq.s32.totalorder %s23, 0
    %p295 = por %p293, %p294
    %p296 = scmp.ne.s32.totalorder %s282, %s283
    %p297 = scmp.eq.s32.totalorder %s24, 1
    %p298 = por %p296, %p297
    %p300 = scmp.ne.s32.totalorder %s283, %s299
    %p301 = scmp.eq.s32.totalorder %s24, 0
    %p302 = por %p300, %p301
    %p303 = scmp.le.s32.totalorder 1, %s18
    %p304 = scmp.lt.s32.totalorder %s18, 3
    %p305 = pnand %p303, %p304
    %p306 = pneg %p305
    // Predicated region
    $region9: #{fdaf_forward.1} parent=5 // pred_check
      _
    $region10: #{fdaf_forward.1} parent=5 // pred_check_branch
      %308 = sbr.rel (%p305) target = $region12
    $region11: #{fdaf_forward.1} parent=5 // pred_region
      %s309 = ssub.s32 %s18, 1
      // Predicated region
      $region13: #{fdaf_forward.1} parent=11 // pred_check
        %p310 = pneg %p117
      $region14: #{fdaf_forward.1} parent=11 // pred_check_branch
        %312 = sbr.rel (%p310) target = $region16
      $region15: #{fdaf_forward.1} parent=11 // pred_region
        _
      $region16: #{fdaf_forward.1} parent=11 // pred_fallthru
        _
      // Predicated region
      $region17: #{fdaf_forward.1} parent=11 // pred_check
        %p313 = pneg %p138
      $region18: #{fdaf_forward.1} parent=11 // pred_check_branch
        %315 = sbr.rel (%p313) target = $region20
      $region19: #{fdaf_forward.1} parent=11 // pred_region
        _
      $region20: #{fdaf_forward.1} parent=11 // pred_fallthru
        _
      // Predicated region
      $region21: #{fdaf_forward.1} parent=11 // pred_check
        %p316 = pneg %p159
      $region22: #{fdaf_forward.1} parent=11 // pred_check_branch
        %318 = sbr.rel (%p316) target = $region24
      $region23: #{fdaf_forward.1} parent=11 // pred_region
        _
      $region24: #{fdaf_forward.1} parent=11 // pred_fallthru
        _
      // Predicated region
      $region25: #{fdaf_forward.1} parent=11 // pred_check
        %p319 = pneg %p180
      $region26: #{fdaf_forward.1} parent=11 // pred_check_branch
        %321 = sbr.rel (%p319) target = $region28
      $region27: #{fdaf_forward.1} parent=11 // pred_region
        _
      $region28: #{fdaf_forward.1} parent=11 // pred_fallthru
        _
      // Predicated region
      $region29: #{fdaf_forward.1} parent=11 // pred_check
        %p322 = pneg %p201
      $region30: #{fdaf_forward.1} parent=11 // pred_check_branch
        %324 = sbr.rel (%p322) target = $region32
      $region31: #{fdaf_forward.1} parent=11 // pred_region
        _
      $region32: #{fdaf_forward.1} parent=11 // pred_fallthru
        _
      // Predicated region
      $region33: #{fdaf_forward.1} parent=11 // pred_check
        %p325 = pneg %p222
      $region34: #{fdaf_forward.1} parent=11 // pred_check_branch
        %327 = sbr.rel (%p325) target = $region36
      $region35: #{fdaf_forward.1} parent=11 // pred_region
        _
      $region36: #{fdaf_forward.1} parent=11 // pred_fallthru
        _
      // Predicated region
      $region37: #{fdaf_forward.1} parent=11 // pred_check
        %p328 = pneg %p243
      $region38: #{fdaf_forward.1} parent=11 // pred_check_branch
        %330 = sbr.rel (%p328) target = $region40
      $region39: #{fdaf_forward.1} parent=11 // pred_region
        _
      $region40: #{fdaf_forward.1} parent=11 // pred_fallthru
        _
    $region12: #{fdaf_forward.1} parent=5 // pred_fallthru
      _
    %p331 = scmp.lt.s32.totalorder %s18, 2
    // Predicated region
    $region41: #{fdaf_forward.1} parent=5 // pred_check
      %p332 = pneg %p331
    $region42: #{fdaf_forward.1} parent=5 // pred_check_branch
      %334 = sbr.rel (%p332) target = $region44
    $region43: #{fdaf_forward.1} parent=5 // pred_region
      // Predicated region
      $region45: #{fdaf_forward.1} parent=43 // pred_check
        %p335 = pneg %p38
      $region46: #{fdaf_forward.1} parent=43 // pred_check_branch
        %337 = sbr.rel (%p335) target = $region48
      $region47: #{fdaf_forward.1} parent=43 // pred_region
        %p338 = scmp.lt.s32.totalorder %s18, 1
        %s339 = scalar_select %p338, %s18, 1
        %s340 = smul.addr %s339, 3
        %s341 = smul.addr %s340, 8
        %s342 = scalar_lea.vmem %s0, %s341
      $region48: #{fdaf_forward.1} parent=43 // pred_fallthru
        _
      // Predicated region
      $region49: #{fdaf_forward.1} parent=43 // pred_check
        %p343 = pneg %p64
      $region50: #{fdaf_forward.1} parent=43 // pred_check_branch
        %345 = sbr.rel (%p343) target = $region52
      $region51: #{fdaf_forward.1} parent=43 // pred_region
        %p346 = scmp.lt.s32.totalorder %s18, 1
        %s347 = scalar_select %p346, %s18, 1
        %s348 = smul.addr %s347, 8
        %s349 = smul.addr %s348, 8
        %s350 = scalar_lea.vmem %s1, %s349
      $region52: #{fdaf_forward.1} parent=43 // pred_fallthru
        _
      // Predicated region
      $region53: #{fdaf_forward.1} parent=43 // pred_check
        %p351 = pneg %p90
      $region54: #{fdaf_forward.1} parent=43 // pred_check_branch
        %353 = sbr.rel (%p351) target = $region56
      $region55: #{fdaf_forward.1} parent=43 // pred_region
        %p354 = scmp.lt.s32.totalorder %s18, 1
        %s355 = scalar_select %p354, %s18, 1
        %s356 = smul.addr %s355, 8
        %s357 = smul.addr %s356, 8
        %s358 = scalar_lea.vmem %s2, %s357
      $region56: #{fdaf_forward.1} parent=43 // pred_fallthru
        _
    $region44: #{fdaf_forward.1} parent=5 // pred_fallthru
      _
    %p359 = scmp.le.s32.totalorder 1, %s18
    %p360 = scmp.lt.s32.totalorder %s18, 3
    %p361 = pnand %p359, %p360
    %p362 = pneg %p361
    // Predicated region
    $region57: #{fdaf_forward.1} parent=5 // pred_check
      _
    $region58: #{fdaf_forward.1} parent=5 // pred_check_branch
      %364 = sbr.rel (%p361) target = $region60
    $region59: #{fdaf_forward.1} parent=5 // pred_region
      %s365 = ssub.s32 %s18, 1
      %p366 = scmp.lt.s32.totalorder %s23, 1
      %s367 = scalar_select %p366, %s23, 1
      %s368 = smul.addr %s367, 3
      %s369 = smul.addr %s368, 8
      %s370 = scalar_lea.vmem %s0, %s369
      %p371 = pneg %p44
      %p372 = pneg %p41
      %p373 = scmp.lt.s32.totalorder %s23, 1
      %s374 = scalar_select %p373, %s23, 1
      %s375 = smul.addr %s374, 8
      %s376 = smul.addr %s375, 8
      %s377 = scalar_lea.vmem %s1, %s376
      %p378 = pneg %p70
      %p379 = pneg %p67
      %p380 = scmp.lt.s32.totalorder %s23, 1
      %s381 = scalar_select %p380, %s23, 1
      %s382 = smul.addr %s381, 8
      %s383 = smul.addr %s382, 8
      %s384 = scalar_lea.vmem %s2, %s383
      %p385 = pneg %p96
      %p386 = pneg %p93
      %p387 = pneg %p117
      %p388 = pneg %p114
      %p389 = pneg %p138
      %p390 = pneg %p135
      %p391 = pneg %p159
      %p392 = pneg %p156
      %p393 = pneg %p180
      %p394 = pneg %p177
      %p395 = pneg %p201
      %p396 = pneg %p198
      %p397 = pneg %p222
      %p398 = pneg %p219
      %p399 = pneg %p243
      %p400 = pneg %p240
      %p401 = pneg %p269
      %p402 = pneg %p266
      %p403 = scmp.lt.s32.totalorder %s23, 1
      %s404 = scalar_select %p403, %s23, 1
      %s405 = smul.addr %s404, 2
      %s406 = smul.addr %s405, 4
      %s407 = scalar_lea.vmem %s10, %s406
      %p408 = pneg %p295
      %p409 = pneg %p292
      %p410 = scmp.lt.s32.totalorder %s23, 1
      %s411 = scalar_select %p410, %s23, 1
      %s412 = smul.addr %s411, 2
      %s413 = smul.addr %s412, 4
      %s414 = scalar_lea.vmem %s11, %s413
      %p415 = scmp.lt.s32.totalorder %s23, 1
      %s416 = scalar_select %p415, %s23, 1
      %s417 = smul.addr %s416, 3
      %s418 = smul.addr %s417, 8
      %s419 = scalar_lea.vmem %s0, %s418
      %p420 = scmp.lt.s32.totalorder %s23, 1
      %s421 = scalar_select %p420, %s23, 1
      %s422 = smul.addr %s421, 8
      %s423 = smul.addr %s422, 8
      %s424 = scalar_lea.vmem %s1, %s423
      %p425 = scmp.lt.s32.totalorder %s23, 1
      %s426 = scalar_select %p425, %s23, 1
      %s427 = smul.addr %s426, 8
      %s428 = smul.addr %s427, 8
      %s429 = scalar_lea.vmem %s2, %s428
      %p430 = scmp.lt.s32.totalorder %s23, 1
      %s431 = scalar_select %p430, %s23, 1
      %s432 = smul.addr %s431, 2
      %s433 = smul.addr %s432, 4
      %s434 = scalar_lea.vmem %s10, %s433
      %p435 = scmp.lt.s32.totalorder %s23, 1
      %s436 = scalar_select %p435, %s23, 1
      %s437 = smul.addr %s436, 2
      %s438 = smul.addr %s437, 4
      %s439 = scalar_lea.vmem %s11, %s438
      %v440 = vld [vmem:[%s419] sm:$0xff]
      %v441 = vld [vmem:[%s419 + $0x8] sm:$0xff]
      %v442 = vld [vmem:[%s419 + $0x10] sm:$0xff]
      %v443 = vld [vmem:[%s7] sm:$0xff]
      %v444 = vld [vmem:[%s3] sm:$0x1f]
      %v445 = vld [vmem:[%s3 + $0x8] sm:$0x1f]
      %v446 = vld [vmem:[%s8] sm:$0xff]
      %448 = vset.pattern.permute.xlu0 0
      %449 = vperm.xlu0 %448, %v446
      %v450 = vpop.permute.xlu0 %449
      %v452 = vlaneseq
      %v453 = vshrl.u32 %v452, 7
      %v454 = vsub.s32 0, %v453
      %v455 = vrot.slane %v444, %v454
      %v456 = vlaneseq
      %v457 = vshrl.u32 %v456, 7
      %v458 = vsub.s32 0, %v457
      %v459 = vrot.slane %v445, %v458
      %v460 = vmul.f32 %v440, %v455
      %v461 = vmul.f32 %v441, %v459
      %463 = vset.pattern.permute.xlu0 0
      %464 = vperm.xlu0 %463, %v443
      %v465 = vpop.permute.xlu0 %464
      %v467 = vmul.f32 %v465, %v460
      %v468 = vmul.f32 %v465, %v461
      %v469 = vadd.f32 %v450, %v467
      %v470 = vadd.f32 %v450, %v468
      %v471 = vlaneseq
      %v472 = vshrl.u32 %v471, 7
      %v473 = vsub.s32 1, %v472
      %v474 = vrot.slane %v444, %v473
      %v475 = vlaneseq
      %v476 = vshrl.u32 %v475, 7
      %v477 = vsub.s32 1, %v476
      %v478 = vrot.slane %v445, %v477
      %481 = vrot.lane.b32.xlu0 %v474, 1
      %v482 = vpop.permute.xlu0 %481
      %483 = vrot.lane.b32.xlu0 %v478, 1
      %v484 = vpop.permute.xlu0 %483
      %vm485 = vcmask 7168
      %v486 = vsel %vm485, %v482, %v484
      %v490 = vmul.f32 %v440, %v482
      %v491 = vmul.f32 %v441, %v486
      %v492 = vmul.f32 %v442, %v484
      %493 = vset.pattern.permute.xlu0 1
      %494 = vperm.xlu0 %493, %v443
      %v495 = vpop.permute.xlu0 %494
      %v497 = vmul.f32 %v495, %v490
      %v498 = vmul.f32 %v495, %v491
      %v499 = vmul.f32 %v495, %v492
      %503 = vrot.lane.b32.xlu0 %v497, 127
      %v504 = vpop.permute.xlu0 %503
      %505 = vrot.lane.b32.xlu0 %v498, 127
      %v506 = vpop.permute.xlu0 %505
      %507 = vrot.lane.b32.xlu0 %v499, 127
      %v508 = vpop.permute.xlu0 %507
      %vm509 = vcmask 1039360
      %v510 = vsel %vm509, %v504, %v506
      %v511 = vsel %vm509, %v506, %v508
      %v514 = vadd.f32 %v469, %v510
      %v515 = vadd.f32 %v470, %v511
      %516 = vset.pattern.permute.xlu0 2
      %517 = vperm.xlu0 %516, %v443
      %v518 = vpop.permute.xlu0 %517
      %v520 = vmul.f32 %v518, %v440
      %v521 = vmul.f32 %v518, %v441
      %v522 = vmul.f32 %v518, %v442
      %526 = vrot.lane.b32.xlu0 %v520, 126
      %v527 = vpop.permute.xlu0 %526
      %528 = vrot.lane.b32.xlu0 %v521, 126
      %v529 = vpop.permute.xlu0 %528
      %530 = vrot.lane.b32.xlu0 %v522, 126
      %v531 = vpop.permute.xlu0 %530
      %vm532 = vcmask 1031168
      %v533 = vsel %vm532, %v527, %v529
      %v534 = vsel %vm532, %v529, %v531
      %v537 = vadd.f32 %v514, %v533
      %v538 = vadd.f32 %v515, %v534
      %v539 = vlaneseq
      %v540 = vshrl.u32 %v539, 7
      %v541 = vsub.s32 3, %v540
      %v542 = vrot.slane %v444, %v541
      %v543 = vlaneseq
      %v544 = vshrl.u32 %v543, 7
      %v545 = vsub.s32 3, %v544
      %v546 = vrot.slane %v445, %v545
      %549 = vrot.lane.b32.xlu0 %v542, 3
      %v550 = vpop.permute.xlu0 %549
      %551 = vrot.lane.b32.xlu0 %v546, 3
      %v552 = vpop.permute.xlu0 %551
      %vm553 = vcmask 23552
      %v554 = vsel %vm553, %v550, %v552
      %v558 = vmul.f32 %v440, %v550
      %v559 = vmul.f32 %v441, %v554
      %v560 = vmul.f32 %v442, %v552
      %561 = vset.pattern.permute.xlu0 3
      %562 = vperm.xlu0 %561, %v443
      %v563 = vpop.permute.xlu0 %562
      %v565 = vmul.f32 %v563, %v558
      %v566 = vmul.f32 %v563, %v559
      %v567 = vmul.f32 %v563, %v560
      %571 = vrot.lane.b32.xlu0 %v565, 125
      %v572 = vpop.permute.xlu0 %571
      %573 = vrot.lane.b32.xlu0 %v566, 125
      %v574 = vpop.permute.xlu0 %573
      %575 = vrot.lane.b32.xlu0 %v567, 125
      %v576 = vpop.permute.xlu0 %575
      %vm577 = vcmask 1022976
      %v578 = vsel %vm577, %v572, %v574
      %v579 = vsel %vm577, %v574, %v576
      %v582 = vadd.f32 %v537, %v578
      %v583 = vadd.f32 %v538, %v579
      %v584 = vlaneseq
      %v585 = vshrl.u32 %v584, 7
      %v586 = vsub.s32 4, %v585
      %v587 = vrot.slane %v444, %v586
      %v588 = vlaneseq
      %v589 = vshrl.u32 %v588, 7
      %v590 = vsub.s32 4, %v589
      %v591 = vrot.slane %v445, %v590
      %594 = vrot.lane.b32.xlu0 %v587, 4
      %v595 = vpop.permute.xlu0 %594
      %596 = vrot.lane.b32.xlu0 %v591, 4
      %v597 = vpop.permute.xlu0 %596
      %vm598 = vcmask 31744
      %v599 = vsel %vm598, %v595, %v597
      %v603 = vmul.f32 %v440, %v595
      %v604 = vmul.f32 %v441, %v599
      %v605 = vmul.f32 %v442, %v597
      %606 = vset.pattern.permute.xlu0 4
      %607 = vperm.xlu0 %606, %v443
      %v608 = vpop.permute.xlu0 %607
      %v610 = vmul.f32 %v608, %v603
      %v611 = vmul.f32 %v608, %v604
      %v612 = vmul.f32 %v608, %v605
      %616 = vrot.lane.b32.xlu0 %v610, 124
      %v617 = vpop.permute.xlu0 %616
      %618 = vrot.lane.b32.xlu0 %v611, 124
      %v619 = vpop.permute.xlu0 %618
      %620 = vrot.lane.b32.xlu0 %v612, 124
      %v621 = vpop.permute.xlu0 %620
      %vm622 = vcmask 1014784
      %v623 = vsel %vm622, %v617, %v619
      %v624 = vsel %vm622, %v619, %v621
      %v627 = vadd.f32 %v582, %v623
      %v628 = vadd.f32 %v583, %v624
      %631 = vrot.lane.b32.xlu0 %v455, 16
      %v632 = vpop.permute.xlu0 %631
      %633 = vrot.lane.b32.xlu0 %v459, 16
      %v634 = vpop.permute.xlu0 %633
      %vm635 = vcmask 130048
      %v636 = vsel %vm635, %v632, %v634
      %v640 = vmul.f32 %v440, %v632
      %v641 = vmul.f32 %v441, %v636
      %v642 = vmul.f32 %v442, %v634
      %643 = vset.pattern.permute.xlu0 5
      %644 = vperm.xlu0 %643, %v443
      %v645 = vpop.permute.xlu0 %644
      %v647 = vmul.f32 %v645, %v640
      %v648 = vmul.f32 %v645, %v641
      %v649 = vmul.f32 %v645, %v642
      %653 = vrot.lane.b32.xlu0 %v647, 112
      %v654 = vpop.permute.xlu0 %653
      %655 = vrot.lane.b32.xlu0 %v648, 112
      %v656 = vpop.permute.xlu0 %655
      %657 = vrot.lane.b32.xlu0 %v649, 112
      %v658 = vpop.permute.xlu0 %657
      %vm659 = vcmask 916480
      %v660 = vsel %vm659, %v654, %v656
      %v661 = vsel %vm659, %v656, %v658
      %v664 = vadd.f32 %v627, %v660
      %v665 = vadd.f32 %v628, %v661
      %666 = vrot.lane.b32.xlu0 %v474, 17
      %v667 = vpop.permute.xlu0 %666
      %668 = vrot.lane.b32.xlu0 %v478, 17
      %v669 = vpop.permute.xlu0 %668
      %vm670 = vcmask 138240
      %v671 = vsel %vm670, %v667, %v669
      %v675 = vmul.f32 %v440, %v667
      %v676 = vmul.f32 %v441, %v671
      %v677 = vmul.f32 %v442, %v669
      %678 = vset.pattern.permute.xlu0 6
      %679 = vperm.xlu0 %678, %v443
      %v680 = vpop.permute.xlu0 %679
      %v682 = vmul.f32 %v680, %v675
      %v683 = vmul.f32 %v680, %v676
      %v684 = vmul.f32 %v680, %v677
      %688 = vrot.lane.b32.xlu0 %v682, 111
      %v689 = vpop.permute.xlu0 %688
      %690 = vrot.lane.b32.xlu0 %v683, 111
      %v691 = vpop.permute.xlu0 %690
      %692 = vrot.lane.b32.xlu0 %v684, 111
      %v693 = vpop.permute.xlu0 %692
      %vm694 = vcmask 908288
      %v695 = vsel %vm694, %v689, %v691
      %v696 = vsel %vm694, %v691, %v693
      %v699 = vadd.f32 %v664, %v695
      %v700 = vadd.f32 %v665, %v696
      %701 = vset.pattern.permute.xlu0 7
      %702 = vperm.xlu0 %701, %v443
      %v703 = vpop.permute.xlu0 %702
      %v705 = vmul.f32 %v703, %v440
      %v706 = vmul.f32 %v703, %v441
      %v707 = vmul.f32 %v703, %v442
      %711 = vrot.lane.b32.xlu0 %v705, 110
      %v712 = vpop.permute.xlu0 %711
      %713 = vrot.lane.b32.xlu0 %v706, 110
      %v714 = vpop.permute.xlu0 %713
      %715 = vrot.lane.b32.xlu0 %v707, 110
      %v716 = vpop.permute.xlu0 %715
      %vm717 = vcmask 900096
      %v718 = vsel %vm717, %v712, %v714
      %v719 = vsel %vm717, %v714, %v716
      %v722 = vadd.f32 %v699, %v718
      %v723 = vadd.f32 %v700, %v719
      %724 = vrot.lane.b32.xlu0 %v542, 19
      %v725 = vpop.permute.xlu0 %724
      %726 = vrot.lane.b32.xlu0 %v546, 19
      %v727 = vpop.permute.xlu0 %726
      %vm728 = vcmask 154624
      %v729 = vsel %vm728, %v725, %v727
      %v733 = vmul.f32 %v440, %v725
      %v734 = vmul.f32 %v441, %v729
      %v735 = vmul.f32 %v442, %v727
      %736 = vset.pattern.permute.xlu0 8
      %737 = vperm.xlu0 %736, %v443
      %v738 = vpop.permute.xlu0 %737
      %v740 = vmul.f32 %v738, %v733
      %v741 = vmul.f32 %v738, %v734
      %v742 = vmul.f32 %v738, %v735
      %746 = vrot.lane.b32.xlu0 %v740, 109
      %v747 = vpop.permute.xlu0 %746
      %748 = vrot.lane.b32.xlu0 %v741, 109
      %v749 = vpop.permute.xlu0 %748
      %750 = vrot.lane.b32.xlu0 %v742, 109
      %v751 = vpop.permute.xlu0 %750
      %vm752 = vcmask 891904
      %v753 = vsel %vm752, %v747, %v749
      %v754 = vsel %vm752, %v749, %v751
      %v757 = vadd.f32 %v722, %v753
      %v758 = vadd.f32 %v723, %v754
      %759 = vrot.lane.b32.xlu0 %v587, 20
      %v760 = vpop.permute.xlu0 %759
      %761 = vrot.lane.b32.xlu0 %v591, 20
      %v762 = vpop.permute.xlu0 %761
      %vm763 = vcmask 162816
      %v764 = vsel %vm763, %v760, %v762
      %v768 = vmul.f32 %v440, %v760
      %v769 = vmul.f32 %v441, %v764
      %v770 = vmul.f32 %v442, %v762
      %771 = vset.pattern.permute.xlu0 9
      %772 = vperm.xlu0 %771, %v443
      %v773 = vpop.permute.xlu0 %772
      %v775 = vmul.f32 %v773, %v768
      %v776 = vmul.f32 %v773, %v769
      %v777 = vmul.f32 %v773, %v770
      %781 = vrot.lane.b32.xlu0 %v775, 108
      %v782 = vpop.permute.xlu0 %781
      %783 = vrot.lane.b32.xlu0 %v776, 108
      %v784 = vpop.permute.xlu0 %783
      %785 = vrot.lane.b32.xlu0 %v777, 108
      %v786 = vpop.permute.xlu0 %785
      %vm787 = vcmask 883712
      %v788 = vsel %vm787, %v782, %v784
      %v789 = vsel %vm787, %v784, %v786
      %v792 = vadd.f32 %v757, %v788
      %v793 = vadd.f32 %v758, %v789
      %794 = vrot.lane.b32.xlu0 %v455, 32
      %v795 = vpop.permute.xlu0 %794
      %796 = vrot.lane.b32.xlu0 %v459, 32
      %v797 = vpop.permute.xlu0 %796
      %vm798 = vcmask 261120
      %v799 = vsel %vm798, %v795, %v797
      %v803 = vmul.f32 %v440, %v795
      %v804 = vmul.f32 %v441, %v799
      %v805 = vmul.f32 %v442, %v797
      %806 = vset.pattern.permute.xlu0 10
      %807 = vperm.xlu0 %806, %v443
      %v808 = vpop.permute.xlu0 %807
      %v810 = vmul.f32 %v808, %v803
      %v811 = vmul.f32 %v808, %v804
      %v812 = vmul.f32 %v808, %v805
      %816 = vrot.lane.b32.xlu0 %v810, 96
      %v817 = vpop.permute.xlu0 %816
      %818 = vrot.lane.b32.xlu0 %v811, 96
      %v819 = vpop.permute.xlu0 %818
      %820 = vrot.lane.b32.xlu0 %v812, 96
      %v821 = vpop.permute.xlu0 %820
      %vm822 = vcmask 785408
      %v823 = vsel %vm822, %v817, %v819
      %v824 = vsel %vm822, %v819, %v821
      %v827 = vadd.f32 %v792, %v823
      %v828 = vadd.f32 %v793, %v824
      %829 = vrot.lane.b32.xlu0 %v474, 33
      %v830 = vpop.permute.xlu0 %829
      %831 = vrot.lane.b32.xlu0 %v478, 33
      %v832 = vpop.permute.xlu0 %831
      %vm833 = vcmask 269312
      %v834 = vsel %vm833, %v830, %v832
      %v838 = vmul.f32 %v440, %v830
      %v839 = vmul.f32 %v441, %v834
      %v840 = vmul.f32 %v442, %v832
      %841 = vset.pattern.permute.xlu0 11
      %842 = vperm.xlu0 %841, %v443
      %v843 = vpop.permute.xlu0 %842
      %v845 = vmul.f32 %v843, %v838
      %v846 = vmul.f32 %v843, %v839
      %v847 = vmul.f32 %v843, %v840
      %851 = vrot.lane.b32.xlu0 %v845, 95
      %v852 = vpop.permute.xlu0 %851
      %853 = vrot.lane.b32.xlu0 %v846, 95
      %v854 = vpop.permute.xlu0 %853
      %855 = vrot.lane.b32.xlu0 %v847, 95
      %v856 = vpop.permute.xlu0 %855
      %vm857 = vcmask 777216
      %v858 = vsel %vm857, %v852, %v854
      %v859 = vsel %vm857, %v854, %v856
      %v862 = vadd.f32 %v827, %v858
      %v863 = vadd.f32 %v828, %v859
      %864 = vset.pattern.permute.xlu0 12
      %865 = vperm.xlu0 %864, %v443
      %v866 = vpop.permute.xlu0 %865
      %v868 = vmul.f32 %v866, %v440
      %v869 = vmul.f32 %v866, %v441
      %v870 = vmul.f32 %v866, %v442
      %874 = vrot.lane.b32.xlu0 %v868, 94
      %v875 = vpop.permute.xlu0 %874
      %876 = vrot.lane.b32.xlu0 %v869, 94
      %v877 = vpop.permute.xlu0 %876
      %878 = vrot.lane.b32.xlu0 %v870, 94
      %v879 = vpop.permute.xlu0 %878
      %vm880 = vcmask 769024
      %v881 = vsel %vm880, %v875, %v877
      %v882 = vsel %vm880, %v877, %v879
      %v885 = vadd.f32 %v862, %v881
      %v886 = vadd.f32 %v863, %v882
      %887 = vrot.lane.b32.xlu0 %v542, 35
      %v888 = vpop.permute.xlu0 %887
      %889 = vrot.lane.b32.xlu0 %v546, 35
      %v890 = vpop.permute.xlu0 %889
      %vm891 = vcmask 285696
      %v892 = vsel %vm891, %v888, %v890
      %v896 = vmul.f32 %v440, %v888
      %v897 = vmul.f32 %v441, %v892
      %v898 = vmul.f32 %v442, %v890
      %899 = vset.pattern.permute.xlu0 13
      %900 = vperm.xlu0 %899, %v443
      %v901 = vpop.permute.xlu0 %900
      %v903 = vmul.f32 %v901, %v896
      %v904 = vmul.f32 %v901, %v897
      %v905 = vmul.f32 %v901, %v898
      %909 = vrot.lane.b32.xlu0 %v903, 93
      %v910 = vpop.permute.xlu0 %909
      %911 = vrot.lane.b32.xlu0 %v904, 93
      %v912 = vpop.permute.xlu0 %911
      %913 = vrot.lane.b32.xlu0 %v905, 93
      %v914 = vpop.permute.xlu0 %913
      %vm915 = vcmask 760832
      %v916 = vsel %vm915, %v910, %v912
      %v917 = vsel %vm915, %v912, %v914
      %v920 = vadd.f32 %v885, %v916
      %v921 = vadd.f32 %v886, %v917
      %922 = vrot.lane.b32.xlu0 %v587, 36
      %v923 = vpop.permute.xlu0 %922
      %924 = vrot.lane.b32.xlu0 %v591, 36
      %v925 = vpop.permute.xlu0 %924
      %vm926 = vcmask 293888
      %v927 = vsel %vm926, %v923, %v925
      %v931 = vmul.f32 %v440, %v923
      %v932 = vmul.f32 %v441, %v927
      %v933 = vmul.f32 %v442, %v925
      %934 = vset.pattern.permute.xlu0 14
      %935 = vperm.xlu0 %934, %v443
      %v936 = vpop.permute.xlu0 %935
      %v938 = vmul.f32 %v936, %v931
      %v939 = vmul.f32 %v936, %v932
      %v940 = vmul.f32 %v936, %v933
      %944 = vrot.lane.b32.xlu0 %v938, 92
      %v945 = vpop.permute.xlu0 %944
      %946 = vrot.lane.b32.xlu0 %v939, 92
      %v947 = vpop.permute.xlu0 %946
      %948 = vrot.lane.b32.xlu0 %v940, 92
      %v949 = vpop.permute.xlu0 %948
      %vm950 = vcmask 752640
      %v951 = vsel %vm950, %v945, %v947
      %v952 = vsel %vm950, %v947, %v949
      %v955 = vadd.f32 %v920, %v951
      %v956 = vadd.f32 %v921, %v952
      %957 = vrot.lane.b32.xlu0 %v455, 48
      %v958 = vpop.permute.xlu0 %957
      %959 = vrot.lane.b32.xlu0 %v459, 48
      %v960 = vpop.permute.xlu0 %959
      %vm961 = vcmask 392192
      %v962 = vsel %vm961, %v958, %v960
      %v966 = vmul.f32 %v440, %v958
      %v967 = vmul.f32 %v441, %v962
      %v968 = vmul.f32 %v442, %v960
      %969 = vset.pattern.permute.xlu0 15
      %970 = vperm.xlu0 %969, %v443
      %v971 = vpop.permute.xlu0 %970
      %v973 = vmul.f32 %v971, %v966
      %v974 = vmul.f32 %v971, %v967
      %v975 = vmul.f32 %v971, %v968
      %979 = vrot.lane.b32.xlu0 %v973, 80
      %v980 = vpop.permute.xlu0 %979
      %981 = vrot.lane.b32.xlu0 %v974, 80
      %v982 = vpop.permute.xlu0 %981
      %983 = vrot.lane.b32.xlu0 %v975, 80
      %v984 = vpop.permute.xlu0 %983
      %vm985 = vcmask 654336
      %v986 = vsel %vm985, %v980, %v982
      %v987 = vsel %vm985, %v982, %v984
      %v990 = vadd.f32 %v955, %v986
      %v991 = vadd.f32 %v956, %v987
      %992 = vrot.lane.b32.xlu0 %v474, 49
      %v993 = vpop.permute.xlu0 %992
      %994 = vrot.lane.b32.xlu0 %v478, 49
      %v995 = vpop.permute.xlu0 %994
      %vm996 = vcmask 400384
      %v997 = vsel %vm996, %v993, %v995
      %v1001 = vmul.f32 %v440, %v993
      %v1002 = vmul.f32 %v441, %v997
      %v1003 = vmul.f32 %v442, %v995
      %1004 = vset.pattern.permute.xlu0 16
      %1005 = vperm.xlu0 %1004, %v443
      %v1006 = vpop.permute.xlu0 %1005
      %v1008 = vmul.f32 %v1006, %v1001
      %v1009 = vmul.f32 %v1006, %v1002
      %v1010 = vmul.f32 %v1006, %v1003
      %1014 = vrot.lane.b32.xlu0 %v1008, 79
      %v1015 = vpop.permute.xlu0 %1014
      %1016 = vrot.lane.b32.xlu0 %v1009, 79
      %v1017 = vpop.permute.xlu0 %1016
      %1018 = vrot.lane.b32.xlu0 %v1010, 79
      %v1019 = vpop.permute.xlu0 %1018
      %vm1020 = vcmask 646144
      %v1021 = vsel %vm1020, %v1015, %v1017
      %v1022 = vsel %vm1020, %v1017, %v1019
      %v1025 = vadd.f32 %v990, %v1021
      %v1026 = vadd.f32 %v991, %v1022
      %1027 = vset.pattern.permute.xlu0 17
      %1028 = vperm.xlu0 %1027, %v443
      %v1029 = vpop.permute.xlu0 %1028
      %v1031 = vmul.f32 %v1029, %v440
      %v1032 = vmul.f32 %v1029, %v441
      %v1033 = vmul.f32 %v1029, %v442
      %1037 = vrot.lane.b32.xlu0 %v1031, 78
      %v1038 = vpop.permute.xlu0 %1037
      %1039 = vrot.lane.b32.xlu0 %v1032, 78
      %v1040 = vpop.permute.xlu0 %1039
      %1041 = vrot.lane.b32.xlu0 %v1033, 78
      %v1042 = vpop.permute.xlu0 %1041
      %vm1043 = vcmask 637952
      %v1044 = vsel %vm1043, %v1038, %v1040
      %v1045 = vsel %vm1043, %v1040, %v1042
      %v1048 = vadd.f32 %v1025, %v1044
      %v1049 = vadd.f32 %v1026, %v1045
      %1050 = vrot.lane.b32.xlu0 %v542, 51
      %v1051 = vpop.permute.xlu0 %1050
      %1052 = vrot.lane.b32.xlu0 %v546, 51
      %v1053 = vpop.permute.xlu0 %1052
      %vm1054 = vcmask 416768
      %v1055 = vsel %vm1054, %v1051, %v1053
      %v1059 = vmul.f32 %v440, %v1051
      %v1060 = vmul.f32 %v441, %v1055
      %v1061 = vmul.f32 %v442, %v1053
      %1062 = vset.pattern.permute.xlu0 18
      %1063 = vperm.xlu0 %1062, %v443
      %v1064 = vpop.permute.xlu0 %1063
      %v1066 = vmul.f32 %v1064, %v1059
      %v1067 = vmul.f32 %v1064, %v1060
      %v1068 = vmul.f32 %v1064, %v1061
      %1072 = vrot.lane.b32.xlu0 %v1066, 77
      %v1073 = vpop.permute.xlu0 %1072
      %1074 = vrot.lane.b32.xlu0 %v1067, 77
      %v1075 = vpop.permute.xlu0 %1074
      %1076 = vrot.lane.b32.xlu0 %v1068, 77
      %v1077 = vpop.permute.xlu0 %1076
      %vm1078 = vcmask 629760
      %v1079 = vsel %vm1078, %v1073, %v1075
      %v1080 = vsel %vm1078, %v1075, %v1077
      %v1083 = vadd.f32 %v1048, %v1079
      %v1084 = vadd.f32 %v1049, %v1080
      %1085 = vrot.lane.b32.xlu0 %v587, 52
      %v1086 = vpop.permute.xlu0 %1085
      %1087 = vrot.lane.b32.xlu0 %v591, 52
      %v1088 = vpop.permute.xlu0 %1087
      %vm1089 = vcmask 424960
      %v1090 = vsel %vm1089, %v1086, %v1088
      %v1094 = vmul.f32 %v440, %v1086
      %v1095 = vmul.f32 %v441, %v1090
      %v1096 = vmul.f32 %v442, %v1088
      %1097 = vset.pattern.permute.xlu0 19
      %1098 = vperm.xlu0 %1097, %v443
      %v1099 = vpop.permute.xlu0 %1098
      %v1101 = vmul.f32 %v1099, %v1094
      %v1102 = vmul.f32 %v1099, %v1095
      %v1103 = vmul.f32 %v1099, %v1096
      %1107 = vrot.lane.b32.xlu0 %v1101, 76
      %v1108 = vpop.permute.xlu0 %1107
      %1109 = vrot.lane.b32.xlu0 %v1102, 76
      %v1110 = vpop.permute.xlu0 %1109
      %1111 = vrot.lane.b32.xlu0 %v1103, 76
      %v1112 = vpop.permute.xlu0 %1111
      %vm1113 = vcmask 621568
      %v1114 = vsel %vm1113, %v1108, %v1110
      %v1115 = vsel %vm1113, %v1110, %v1112
      %v1118 = vadd.f32 %v1083, %v1114
      %v1119 = vadd.f32 %v1084, %v1115
      %1120 = vrot.lane.b32.xlu0 %v455, 64
      %v1121 = vpop.permute.xlu0 %1120
      %1122 = vrot.lane.b32.xlu0 %v459, 64
      %v1123 = vpop.permute.xlu0 %1122
      %vm1124 = vcmask 523264
      %v1125 = vsel %vm1124, %v1121, %v1123
      %v1129 = vmul.f32 %v440, %v1121
      %v1130 = vmul.f32 %v441, %v1125
      %v1131 = vmul.f32 %v442, %v1123
      %1132 = vset.pattern.permute.xlu0 20
      %1133 = vperm.xlu0 %1132, %v443
      %v1134 = vpop.permute.xlu0 %1133
      %v1136 = vmul.f32 %v1134, %v1129
      %v1137 = vmul.f32 %v1134, %v1130
      %v1138 = vmul.f32 %v1134, %v1131
      %1142 = vrot.lane.b32.xlu0 %v1136, 64
      %v1143 = vpop.permute.xlu0 %1142
      %1144 = vrot.lane.b32.xlu0 %v1137, 64
      %v1145 = vpop.permute.xlu0 %1144
      %1146 = vrot.lane.b32.xlu0 %v1138, 64
      %v1147 = vpop.permute.xlu0 %1146
      %v1148 = vsel %vm1124, %v1143, %v1145
      %v1149 = vsel %vm1124, %v1145, %v1147
      %v1152 = vadd.f32 %v1118, %v1148
      %v1153 = vadd.f32 %v1119, %v1149
      %1154 = vrot.lane.b32.xlu0 %v474, 65
      %v1155 = vpop.permute.xlu0 %1154
      %1156 = vrot.lane.b32.xlu0 %v478, 65
      %v1157 = vpop.permute.xlu0 %1156
      %vm1158 = vcmask 531456
      %v1159 = vsel %vm1158, %v1155, %v1157
      %v1163 = vmul.f32 %v440, %v1155
      %v1164 = vmul.f32 %v441, %v1159
      %v1165 = vmul.f32 %v442, %v1157
      %1166 = vset.pattern.permute.xlu0 21
      %1167 = vperm.xlu0 %1166, %v443
      %v1168 = vpop.permute.xlu0 %1167
      %v1170 = vmul.f32 %v1168, %v1163
      %v1171 = vmul.f32 %v1168, %v1164
      %v1172 = vmul.f32 %v1168, %v1165
      %1176 = vrot.lane.b32.xlu0 %v1170, 63
      %v1177 = vpop.permute.xlu0 %1176
      %1178 = vrot.lane.b32.xlu0 %v1171, 63
      %v1179 = vpop.permute.xlu0 %1178
      %1180 = vrot.lane.b32.xlu0 %v1172, 63
      %v1181 = vpop.permute.xlu0 %1180
      %vm1182 = vcmask 515072
      %v1183 = vsel %vm1182, %v1177, %v1179
      %v1184 = vsel %vm1182, %v1179, %v1181
      %v1187 = vadd.f32 %v1152, %v1183
      %v1188 = vadd.f32 %v1153, %v1184
      %1189 = vset.pattern.permute.xlu0 22
      %1190 = vperm.xlu0 %1189, %v443
      %v1191 = vpop.permute.xlu0 %1190
      %v1193 = vmul.f32 %v1191, %v440
      %v1194 = vmul.f32 %v1191, %v441
      %v1195 = vmul.f32 %v1191, %v442
      %1199 = vrot.lane.b32.xlu0 %v1193, 62
      %v1200 = vpop.permute.xlu0 %1199
      %1201 = vrot.lane.b32.xlu0 %v1194, 62
      %v1202 = vpop.permute.xlu0 %1201
      %1203 = vrot.lane.b32.xlu0 %v1195, 62
      %v1204 = vpop.permute.xlu0 %1203
      %vm1205 = vcmask 506880
      %v1206 = vsel %vm1205, %v1200, %v1202
      %v1207 = vsel %vm1205, %v1202, %v1204
      %v1210 = vadd.f32 %v1187, %v1206
      %v1211 = vadd.f32 %v1188, %v1207
      %1212 = vrot.lane.b32.xlu0 %v542, 67
      %v1213 = vpop.permute.xlu0 %1212
      %1214 = vrot.lane.b32.xlu0 %v546, 67
      %v1215 = vpop.permute.xlu0 %1214
      %vm1216 = vcmask 547840
      %v1217 = vsel %vm1216, %v1213, %v1215
      %v1221 = vmul.f32 %v440, %v1213
      %v1222 = vmul.f32 %v441, %v1217
      %v1223 = vmul.f32 %v442, %v1215
      %1224 = vset.pattern.permute.xlu0 23
      %1225 = vperm.xlu0 %1224, %v443
      %v1226 = vpop.permute.xlu0 %1225
      %v1228 = vmul.f32 %v1226, %v1221
      %v1229 = vmul.f32 %v1226, %v1222
      %v1230 = vmul.f32 %v1226, %v1223
      %1234 = vrot.lane.b32.xlu0 %v1228, 61
      %v1235 = vpop.permute.xlu0 %1234
      %1236 = vrot.lane.b32.xlu0 %v1229, 61
      %v1237 = vpop.permute.xlu0 %1236
      %1238 = vrot.lane.b32.xlu0 %v1230, 61
      %v1239 = vpop.permute.xlu0 %1238
      %vm1240 = vcmask 498688
      %v1241 = vsel %vm1240, %v1235, %v1237
      %v1242 = vsel %vm1240, %v1237, %v1239
      %v1245 = vadd.f32 %v1210, %v1241
      %v1246 = vadd.f32 %v1211, %v1242
      %1247 = vrot.lane.b32.xlu0 %v587, 68
      %v1248 = vpop.permute.xlu0 %1247
      %1249 = vrot.lane.b32.xlu0 %v591, 68
      %v1250 = vpop.permute.xlu0 %1249
      %vm1251 = vcmask 556032
      %v1252 = vsel %vm1251, %v1248, %v1250
      %v1256 = vmul.f32 %v440, %v1248
      %v1257 = vmul.f32 %v441, %v1252
      %v1258 = vmul.f32 %v442, %v1250
      %1259 = vset.pattern.permute.xlu0 24
      %1260 = vperm.xlu0 %1259, %v443
      %v1261 = vpop.permute.xlu0 %1260
      %v1263 = vmul.f32 %v1261, %v1256
      %v1264 = vmul.f32 %v1261, %v1257
      %v1265 = vmul.f32 %v1261, %v1258
      %1269 = vrot.lane.b32.xlu0 %v1263, 60
      %v1270 = vpop.permute.xlu0 %1269
      %1271 = vrot.lane.b32.xlu0 %v1264, 60
      %v1272 = vpop.permute.xlu0 %1271
      %1273 = vrot.lane.b32.xlu0 %v1265, 60
      %v1274 = vpop.permute.xlu0 %1273
      %vm1275 = vcmask 490496
      %v1276 = vsel %vm1275, %v1270, %v1272
      %v1277 = vsel %vm1275, %v1272, %v1274
      %v1280 = vadd.f32 %v1245, %v1276
      %v1281 = vadd.f32 %v1246, %v1277
      %v1282 = vadd.f32 %v1280, %v1281
      %1283 = vadd.xlane.f32.xlu0 %v1282
      %v1284 = vpop.xlane.xlu0 %1283
      %v1285 = vrcp.pop 256.0
      %v1286 = vmul.f32 %v1284, %v1285
      %v1287 = vsub.f32 %v1280, %v1286
      %v1288 = vsub.f32 %v1281, %v1286
      %v1289 = vmul.f32 %v1287, %v1287
      %v1290 = vmul.f32 %v1288, %v1288
      %v1291 = vadd.f32 %v1289, %v1290
      %1292 = vadd.xlane.f32.xlu0 %v1291
      %v1293 = vpop.xlane.xlu0 %1292
      %v1294 = vmul.f32 %v1293, %v1285
      %v1295 = vadd.f32 %v1294, 1e-05
      %v1296 = vrsqrt.pop %v1295
      %v1297 = vmul.f32 %v1287, %v1296
      %v1298 = vmul.f32 %v1288, %v1296
      %v1299 = vmul.f32 %v1297, 0.70710677
      %v1300 = vmul.f32 %v1298, 0.70710677
      %v1301 = vand.u32 2147483647, %v1299
      %v1302 = vand.u32 2147483647, %v1300
      %v1303 = vmul.f32 %v1301, 0.3275911
      %v1304 = vmul.f32 %v1302, 0.3275911
      %v1305 = vadd.f32 %v1303, 1.0
      %v1306 = vadd.f32 %v1304, 1.0
      %v1307 = vrcp.pop %v1305
      %v1308 = vmul.f32 1.0, %v1307
      %v1309 = vrcp.pop %v1306
      %v1310 = vmul.f32 1.0, %v1309
      %v1311 = vmul.f32 %v1308, 1.0614054
      %v1312 = vmul.f32 %v1310, 1.0614054
      %v1313 = vadd.f32 %v1311, -1.4531521
      %v1314 = vadd.f32 %v1312, -1.4531521
      %v1315 = vmul.f32 %v1308, %v1313
      %v1316 = vmul.f32 %v1310, %v1314
      %v1317 = vadd.f32 %v1315, 1.4214138
      %v1318 = vadd.f32 %v1316, 1.4214138
      %v1319 = vmul.f32 %v1308, %v1317
      %v1320 = vmul.f32 %v1310, %v1318
      %v1321 = vadd.f32 %v1319, -0.28449672
      %v1322 = vadd.f32 %v1320, -0.28449672
      %v1323 = vmul.f32 %v1308, %v1321
      %v1324 = vmul.f32 %v1310, %v1322
      %v1325 = vadd.f32 %v1323, 0.2548296
      %v1326 = vadd.f32 %v1324, 0.2548296
      %v1327 = vmul.f32 %v1308, %v1325
      %v1328 = vmul.f32 %v1310, %v1326
      %v1329 = vsub.f32 0.0, %v1301
      %v1330 = vsub.f32 0.0, %v1302
      %v1331 = vmul.f32 %v1329, %v1301
      %v1332 = vmul.f32 %v1330, %v1302
      %v1333 = vmul.f32 %v1331, 1.442695
      %v1334 = vpow.pop %v1333
      %v1335 = vmul.f32 %v1332, 1.442695
      %v1336 = vpow.pop %v1335
      %v1337 = vmul.f32 %v1327, %v1334
      %v1338 = vmul.f32 %v1328, %v1336
      %v1339 = vsub.f32 1.0, %v1337
      %v1340 = vsub.f32 1.0, %v1338
      %vm1341 = vcmp.ge.f32.partialorder %v1299, 0.0
      %vm1342 = vcmp.ge.f32.partialorder %v1300, 0.0
      %v1343 = vsub.f32 0.0, %v1339
      %v1344 = vsub.f32 0.0, %v1340
      %v1345 = vsel %vm1341, %v1339, %v1343
      %v1346 = vsel %vm1342, %v1340, %v1344
      %v1347 = vmul.f32 %v1297, 0.5
      %v1348 = vmul.f32 %v1298, 0.5
      %v1349 = vadd.f32 %v1345, 1.0
      %v1350 = vadd.f32 %v1346, 1.0
      %v1351 = vmul.f32 %v1347, %v1349
      %v1352 = vmul.f32 %v1348, %v1350
      %v1353 = vld [vmem:[%s9] sm:$0xf]
      %vm1354 = vcmask 64512
      %v1356 = vsel %vm1354, %v1353, 0
      %1358 = vmatprep.subr.mxu0 %v1352
      %1359 = vmatpush1.msra.mxu0 %v1351
      %1360 = vmatprep.subr.mxu0 0.0
      %1361 = vmatpush1.msra.mxu0 0.0
      %1362 = vmatprep.subr.mxu0 0.0
      %1363 = vmatpush1.msra.mxu0 0.0
      %1364 = vmatprep.subr.mxu0 0.0
      %1365 = vmatpush1.msra.mxu0 0.0
      %1366 = vmatprep.subr.mxu0 0.0
      %1367 = vmatpush1.msra.mxu0 0.0
      %1368 = vmatprep.subr.mxu0 0.0
      %1369 = vmatpush1.msra.mxu0 0.0
      %1370 = vmatprep.subr.mxu0 0.0
      %1371 = vmatpush1.msra.mxu0 0.0
      %1372 = vmatprep.subr.mxu0 0.0
      %1373 = vmatpush1.msra.mxu0 0.0
      %1374 = vmatprep.subr.mxu0 0.0
      %1375 = vmatpush1.msra.mxu0 0.0
      %1376 = vmatprep.subr.mxu0 0.0
      %1377 = vmatpush1.msra.mxu0 0.0
      %1378 = vmatprep.subr.mxu0 0.0
      %1379 = vmatpush1.msra.mxu0 0.0
      %1380 = vmatprep.subr.mxu0 0.0
      %1381 = vmatpush1.msra.mxu0 0.0
      %1382 = vmatprep.subr.mxu0 0.0
      %1383 = vmatpush1.msra.mxu0 0.0
      %1384 = vmatprep.subr.mxu0 0.0
      %1385 = vmatpush1.msra.mxu0 0.0
      %1386 = vmatprep.subr.mxu0 0.0
      %1387 = vmatpush1.msra.mxu0 0.0
      %1388 = vmatprep.subr.mxu0 0.0
      %1389 = vmatpush1.msra.mxu0 0.0
      %1390 = vmatprep.subr.mxu0 0.0
      %1391 = vmatpush1.msra.mxu0 0.0
      %1392 = vmatprep.subr.mxu0 0.0
      %1393 = vmatpush1.msra.mxu0 0.0
      %1394 = vmatprep.subr.mxu0 0.0
      %1395 = vmatpush1.msra.mxu0 0.0
      %1396 = vmatprep.subr.mxu0 0.0
      %1397 = vmatpush1.msra.mxu0 0.0
      %1398 = vmatprep.subr.mxu0 0.0
      %1399 = vmatpush1.msra.mxu0 0.0
      %1400 = vmatprep.subr.mxu0 0.0
      %1401 = vmatpush1.msra.mxu0 0.0
      %1402 = vmatprep.subr.mxu0 0.0
      %1403 = vmatpush1.msra.mxu0 0.0
      %1404 = vmatprep.subr.mxu0 0.0
      %1405 = vmatpush1.msra.mxu0 0.0
      %1406 = vmatprep.subr.mxu0 0.0
      %1407 = vmatpush1.msra.mxu0 0.0
      %1408 = vmatprep.subr.mxu0 0.0
      %1409 = vmatpush1.msra.mxu0 0.0
      %1410 = vmatprep.subr.mxu0 0.0
      %1411 = vmatpush1.msra.mxu0 0.0
      %1412 = vmatprep.subr.mxu0 0.0
      %1413 = vmatpush1.msra.mxu0 0.0
      %1414 = vmatprep.subr.mxu0 0.0
      %1415 = vmatpush1.msra.mxu0 0.0
      %1416 = vmatprep.subr.mxu0 0.0
      %1417 = vmatpush1.msra.mxu0 0.0
      %1418 = vmatprep.subr.mxu0 0.0
      %1419 = vmatpush1.msra.mxu0 0.0
      %1420 = vmatprep.subr.mxu0 0.0
      %1421 = vmatpush1.msra.mxu0 0.0
      %1422 = vmatprep.mubr.f32.mxu0 0.0
      %1423 = vmatmul.mubr.f32.gmra.mrb[0].mxu0 %v1356
      %v1424 = vpop.f32.mrb[0].mxu0
      %v1425 = vadd.f32 0.0, %v1424
      %v1426 = vpop.f32.mrb[0].mxu0
      %v1427 = vadd.f32 0.0, %v1426
      %1428 = vdwg.mxu0
      %v1429 = vld [vmem:[%s4] ss:$2 sm:$0x3]
      %s1430 = scalar_lea.vmem %s4, 1
      %v1431 = vld [vmem:[%s1430] ss:$2 sm:$0x3]
      %v1432 = vlaneseq
      %v1433 = vshrl.u32 %v1432, 7
      %v1434 = vadd.s32 %v1433, 8
      %v1435 = vld [vmem:[%s5] sm:$0xff]
      %v1436 = vld [vmem:[%s5 + $0x8] sm:$0xff]
      %v1437 = vld [vmem:[%s5 + $0x10] sm:$0xff]
      %v1438 = vld [vmem:[%s5 + $0x18] sm:$0xff]
      %v1439 = vld [vmem:[%s5 + $0x20] sm:$0xff]
      %v1440 = vld [vmem:[%s5 + $0x28] sm:$0xff]
      %v1441 = vld [vmem:[%s5 + $0x30] sm:$0xff]
      %v1442 = vld [vmem:[%s5 + $0x38] sm:$0xff]
      %v1443 = vld [vmem:[%s6] sm:$0xf]
      %v1444 = vld [vmem:[%s424] sm:$0xff]
      %v1445 = vld [vmem:[%s424 + $0x8] sm:$0xff]
      %v1446 = vld [vmem:[%s424 + $0x10] sm:$0xff]
      %v1447 = vld [vmem:[%s424 + $0x18] sm:$0xff]
      %v1448 = vld [vmem:[%s424 + $0x20] sm:$0xff]
      %v1449 = vld [vmem:[%s424 + $0x28] sm:$0xff]
      %v1450 = vld [vmem:[%s424 + $0x30] sm:$0xff]
      %v1451 = vld [vmem:[%s424 + $0x38] sm:$0xff]
      %v1452 = vmul.f32 %v1425, 0.0625
      %v1453 = vmul.f32 %v1427, 0.0625
      %v1456 = vcombine.low %v1452, %v1453
      %v1458 = vunpack.c.l.s4 1966171168
      %v1459 = vunpack.c.0.s8 %v1458
      %v1460 = vlaneseq
      %v1461 = vshrl.u32 %v1460, 7
      %v1462 = vsub.s32 %v1459, %v1461
      %v1463 = vrot.slane %v1456, %v1462
      %v1465 = vunpack.c.l.s4 1966171168
      %v1466 = vunpack.c.0.s8 %v1465
      %v1467 = vlaneseq
      %v1468 = vshrl.u32 %v1467, 7
      %v1469 = vsub.s32 %v1466, %v1468
      %v1470 = vrot.slane %v1463, %v1469
      %v1472 = vadd.f32 %v1429, %v1470
      %v1473 = vadd.f32 %v1472, 1.0
      %v1474 = vmul.f32 %v1473, 7.5
      %v1475 = vcombine.high %v1463, %v1463
      %v1477 = vunpack.c.l.s4 1966171168
      %v1478 = vunpack.c.0.s8 %v1477
      %v1479 = vlaneseq
      %v1480 = vshrl.u32 %v1479, 7
      %v1481 = vsub.s32 %v1478, %v1480
      %v1482 = vrot.slane %v1475, %v1481
      %v1484 = vadd.f32 %v1431, %v1482
      %v1485 = vadd.f32 %v1484, 1.0
      %v1486 = vmul.f32 %v1485, 7.5
      %v1487 = vfloor.f32 %v1474
      %v1488 = vcvt.f32.s32.to.zero.pseudo %v1487
      %v1489 = vsub.f32 %v1474, %v1487
      %v1490 = vlaneseq
      %v1491 = vshrl.u32 %v1490, 7
      %v1492 = vsub.s32 0, %v1491
      %v1493 = vrot.slane %v1488, %v1492
      %v1494 = vlaneseq
      %v1495 = vshrl.u32 %v1494, 7
      %v1496 = vsub.s32 1, %v1495
      %v1497 = vrot.slane %v1488, %v1496
      %vm1498 = vcmp.eq.s32.totalorder %v1433, %v1493
      %vm1499 = vcmp.eq.s32.totalorder %v1433, %v1497
      %vm1500 = vcmp.eq.s32.totalorder %v1434, %v1493
      %vm1501 = vcmp.eq.s32.totalorder %v1434, %v1497
      %v1502 = vsub.f32 1.0, %v1489
      %v1504 = vlaneseq
      %v1505 = vshrl.u32 %v1504, 7
      %v1506 = vsub.s32 0, %v1505
      %v1507 = vrot.slane %v1502, %v1506
      %v1508 = vlaneseq
      %v1509 = vshrl.u32 %v1508, 7
      %v1510 = vsub.s32 1, %v1509
      %v1511 = vrot.slane %v1502, %v1510
      %v1514 = vsel %vm1498, %v1507, 0.0
      %v1515 = vsel %vm1499, %v1511, 0.0
      %v1516 = vsel %vm1500, %v1507, 0.0
      %v1517 = vsel %vm1501, %v1511, 0.0
      %v1518 = vadd.s32 %v1488, 1
      %v1519 = vlaneseq
      %v1520 = vshrl.u32 %v1519, 7
      %v1521 = vsub.s32 0, %v1520
      %v1522 = vrot.slane %v1518, %v1521
      %v1523 = vlaneseq
      %v1524 = vshrl.u32 %v1523, 7
      %v1525 = vsub.s32 1, %v1524
      %v1526 = vrot.slane %v1518, %v1525
      %vm1527 = vcmp.eq.s32.totalorder %v1433, %v1522
      %vm1528 = vcmp.eq.s32.totalorder %v1433, %v1526
      %vm1529 = vcmp.eq.s32.totalorder %v1434, %v1522
      %vm1530 = vcmp.eq.s32.totalorder %v1434, %v1526
      %v1532 = vlaneseq
      %v1533 = vshrl.u32 %v1532, 7
      %v1534 = vsub.s32 0, %v1533
      %v1535 = vrot.slane %v1489, %v1534
      %v1536 = vlaneseq
      %v1537 = vshrl.u32 %v1536, 7
      %v1538 = vsub.s32 1, %v1537
      %v1539 = vrot.slane %v1489, %v1538
      %v1542 = vsel %vm1527, %v1535, 0.0
      %v1543 = vsel %vm1528, %v1539, 0.0
      %v1544 = vsel %vm1529, %v1535, 0.0
      %v1545 = vsel %vm1530, %v1539, 0.0
      %v1546 = vadd.f32 %v1514, %v1542
      %v1547 = vadd.f32 %v1515, %v1543
      %v1548 = vadd.f32 %v1516, %v1544
      %v1549 = vadd.f32 %v1517, %v1545
      %v1550 = vfloor.f32 %v1486
      %v1551 = vcvt.f32.s32.to.zero.pseudo %v1550
      %v1552 = vsub.f32 %v1486, %v1550
      %v1553 = vlaneseq
      %v1554 = vshrl.u32 %v1553, 7
      %v1555 = vsub.s32 0, %v1554
      %v1556 = vrot.slane %v1551, %v1555
      %v1557 = vlaneseq
      %v1558 = vshrl.u32 %v1557, 7
      %v1559 = vsub.s32 1, %v1558
      %v1560 = vrot.slane %v1551, %v1559
      %vm1561 = vcmp.eq.s32.totalorder %v1433, %v1556
      %vm1562 = vcmp.eq.s32.totalorder %v1433, %v1560
      %vm1563 = vcmp.eq.s32.totalorder %v1434, %v1556
      %vm1564 = vcmp.eq.s32.totalorder %v1434, %v1560
      %v1565 = vsub.f32 1.0, %v1552
      %v1567 = vlaneseq
      %v1568 = vshrl.u32 %v1567, 7
      %v1569 = vsub.s32 0, %v1568
      %v1570 = vrot.slane %v1565, %v1569
      %v1571 = vlaneseq
      %v1572 = vshrl.u32 %v1571, 7
      %v1573 = vsub.s32 1, %v1572
      %v1574 = vrot.slane %v1565, %v1573
      %v1577 = vsel %vm1561, %v1570, 0.0
      %v1578 = vsel %vm1562, %v1574, 0.0
      %v1579 = vsel %vm1563, %v1570, 0.0
      %v1580 = vsel %vm1564, %v1574, 0.0
      %v1581 = vadd.s32 %v1551, 1
      %v1582 = vlaneseq
      %v1583 = vshrl.u32 %v1582, 7
      %v1584 = vsub.s32 0, %v1583
      %v1585 = vrot.slane %v1581, %v1584
      %v1586 = vlaneseq
      %v1587 = vshrl.u32 %v1586, 7
      %v1588 = vsub.s32 1, %v1587
      %v1589 = vrot.slane %v1581, %v1588
      %vm1590 = vcmp.eq.s32.totalorder %v1433, %v1585
      %vm1591 = vcmp.eq.s32.totalorder %v1433, %v1589
      %vm1592 = vcmp.eq.s32.totalorder %v1434, %v1585
      %vm1593 = vcmp.eq.s32.totalorder %v1434, %v1589
      %v1595 = vlaneseq
      %v1596 = vshrl.u32 %v1595, 7
      %v1597 = vsub.s32 0, %v1596
      %v1598 = vrot.slane %v1552, %v1597
      %v1599 = vlaneseq
      %v1600 = vshrl.u32 %v1599, 7
      %v1601 = vsub.s32 1, %v1600
      %v1602 = vrot.slane %v1552, %v1601
      %v1605 = vsel %vm1590, %v1598, 0.0
      %v1606 = vsel %vm1591, %v1602, 0.0
      %v1607 = vsel %vm1592, %v1598, 0.0
      %v1608 = vsel %vm1593, %v1602, 0.0
      %v1609 = vadd.f32 %v1577, %v1605
      %v1610 = vadd.f32 %v1578, %v1606
      %v1611 = vadd.f32 %v1579, %v1607
      %v1612 = vadd.f32 %v1580, %v1608
      %v1614 = vsel %vm635, %v1444, 0
      %v1617 = vsel %vm635, %v1445, 0
      %v1620 = vsel %vm635, %v1446, 0
      %v1623 = vsel %vm635, %v1447, 0
      %v1626 = vsel %vm635, %v1448, 0
      %v1629 = vsel %vm635, %v1449, 0
      %v1632 = vsel %vm635, %v1450, 0
      %v1635 = vsel %vm635, %v1451, 0
      %1637 = vmatprep.subr.mxu0 %v1547
      %1638 = vmatpush1.msra.mxu0 %v1546
      %1639 = vmatprep.subr.mxu0 %v1549
      %1640 = vmatpush1.msra.mxu0 %v1548
      %1641 = vmatprep.subr.mxu0 0.0
      %1642 = vmatpush1.msra.mxu0 0.0
      %1643 = vmatprep.subr.mxu0 0.0
      %1644 = vmatpush1.msra.mxu0 0.0
      %1645 = vmatprep.subr.mxu0 0.0
      %1646 = vmatpush1.msra.mxu0 0.0
      %1647 = vmatprep.subr.mxu0 0.0
      %1648 = vmatpush1.msra.mxu0 0.0
      %1649 = vmatprep.subr.mxu0 0.0
      %1650 = vmatpush1.msra.mxu0 0.0
      %1651 = vmatprep.subr.mxu0 0.0
      %1652 = vmatpush1.msra.mxu0 0.0
      %1653 = vmatprep.subr.mxu0 0.0
      %1654 = vmatpush1.msra.mxu0 0.0
      %1655 = vmatprep.subr.mxu0 0.0
      %1656 = vmatpush1.msra.mxu0 0.0
      %1657 = vmatprep.subr.mxu0 0.0
      %1658 = vmatpush1.msra.mxu0 0.0
      %1659 = vmatprep.subr.mxu0 0.0
      %1660 = vmatpush1.msra.mxu0 0.0
      %1661 = vmatprep.subr.mxu0 0.0
      %1662 = vmatpush1.msra.mxu0 0.0
      %1663 = vmatprep.subr.mxu0 0.0
      %1664 = vmatpush1.msra.mxu0 0.0
      %1665 = vmatprep.subr.mxu0 0.0
      %1666 = vmatpush1.msra.mxu0 0.0
      %1667 = vmatprep.subr.mxu0 0.0
      %1668 = vmatpush1.msra.mxu0 0.0
      %1669 = vmatprep.subr.mxu0 0.0
      %1670 = vmatpush1.msra.mxu0 0.0
      %1671 = vmatprep.subr.mxu0 0.0
      %1672 = vmatpush1.msra.mxu0 0.0
      %1673 = vmatprep.subr.mxu0 0.0
      %1674 = vmatpush1.msra.mxu0 0.0
      %1675 = vmatprep.subr.mxu0 0.0
      %1676 = vmatpush1.msra.mxu0 0.0
      %1677 = vmatprep.subr.mxu0 0.0
      %1678 = vmatpush1.msra.mxu0 0.0
      %1679 = vmatprep.subr.mxu0 0.0
      %1680 = vmatpush1.msra.mxu0 0.0
      %1681 = vmatprep.subr.mxu0 0.0
      %1682 = vmatpush1.msra.mxu0 0.0
      %1683 = vmatprep.subr.mxu0 0.0
      %1684 = vmatpush1.msra.mxu0 0.0
      %1685 = vmatprep.subr.mxu0 0.0
      %1686 = vmatpush1.msra.mxu0 0.0
      %1687 = vmatprep.subr.mxu0 0.0
      %1688 = vmatpush1.msra.mxu0 0.0
      %1689 = vmatprep.subr.mxu0 0.0
      %1690 = vmatpush1.msra.mxu0 0.0
      %1691 = vmatprep.subr.mxu0 0.0
      %1692 = vmatpush1.msra.mxu0 0.0
      %1693 = vmatprep.subr.mxu0 0.0
      %1694 = vmatpush1.msra.mxu0 0.0
      %1695 = vmatprep.subr.mxu0 0.0
      %1696 = vmatpush1.msra.mxu0 0.0
      %1697 = vmatprep.subr.mxu0 0.0
      %1698 = vmatpush1.msra.mxu0 0.0
      %1699 = vmatprep.subr.mxu0 0.0
      %1700 = vmatpush1.msra.mxu0 0.0
      %1701 = vmatprep.mubr.f32.mxu0 0.0
      %1702 = vmatmul.mubr.f32.gmra.mrb[0].mxu0 %v1614
      %v1703 = vpop.f32.mrb[0].mxu0
      %v1704 = vadd.f32 0.0, %v1703
      %v1705 = vpop.f32.mrb[0].mxu0
      %v1706 = vadd.f32 0.0, %v1705
      %1707 = vmatprep.mubr.f32.mxu0 0.0
      %1708 = vmatmul.mubr.f32.gmra.mrb[0].mxu0 %v1617
      %v1709 = vpop.f32.mrb[0].mxu0
      %v1710 = vadd.f32 0.0, %v1709
      %v1711 = vpop.f32.mrb[0].mxu0
      %v1712 = vadd.f32 0.0, %v1711
      %1713 = vmatprep.mubr.f32.mxu0 0.0
      %1714 = vmatmul.mubr.f32.gmra.mrb[0].mxu0 %v1620
      %v1715 = vpop.f32.mrb[0].mxu0
      %v1716 = vadd.f32 0.0, %v1715
      %v1717 = vpop.f32.mrb[0].mxu0
      %v1718 = vadd.f32 0.0, %v1717
      %1719 = vmatprep.mubr.f32.mxu0 0.0
      %1720 = vmatmul.mubr.f32.gmra.mrb[0].mxu0 %v1623
      %v1721 = vpop.f32.mrb[0].mxu0
      %v1722 = vadd.f32 0.0, %v1721
      %v1723 = vpop.f32.mrb[0].mxu0
      %v1724 = vadd.f32 0.0, %v1723
      %1725 = vmatprep.mubr.f32.mxu0 0.0
      %1726 = vmatmul.mubr.f32.gmra.mrb[0].mxu0 %v1626
      %v1727 = vpop.f32.mrb[0].mxu0
      %v1728 = vadd.f32 0.0, %v1727
      %v1729 = vpop.f32.mrb[0].mxu0
      %v1730 = vadd.f32 0.0, %v1729
      %1731 = vmatprep.mubr.f32.mxu0 0.0
      %1732 = vmatmul.mubr.f32.gmra.mrb[0].mxu0 %v1629
      %v1733 = vpop.f32.mrb[0].mxu0
      %v1734 = vadd.f32 0.0, %v1733
      %v1735 = vpop.f32.mrb[0].mxu0
      %v1736 = vadd.f32 0.0, %v1735
      %1737 = vmatprep.mubr.f32.mxu0 0.0
      %1738 = vmatmul.mubr.f32.gmra.mrb[0].mxu0 %v1632
      %v1739 = vpop.f32.mrb[0].mxu0
      %v1740 = vadd.f32 0.0, %v1739
      %v1741 = vpop.f32.mrb[0].mxu0
      %v1742 = vadd.f32 0.0, %v1741
      %1743 = vmatprep.mubr.f32.mxu0 0.0
      %1744 = vmatmul.mubr.f32.gmra.mrb[0].mxu0 %v1635
      %v1745 = vpop.f32.mrb[0].mxu0
      %v1746 = vadd.f32 0.0, %v1745
      %v1747 = vpop.f32.mrb[0].mxu0
      %v1748 = vadd.f32 0.0, %v1747
      %1749 = vdwg.mxu0
      %v1751 = vsel %vm635, %v1435, 0
      %v1754 = vsel %vm635, %v1436, 0
      %v1757 = vsel %vm635, %v1437, 0
      %v1760 = vsel %vm635, %v1438, 0
      %v1763 = vsel %vm635, %v1439, 0
      %v1766 = vsel %vm635, %v1440, 0
      %v1769 = vsel %vm635, %v1441, 0
      %v1772 = vsel %vm635, %v1442, 0
      %1774 = vmatprep.subr.mxu0 %v1610
      %1775 = vmatpush1.msra.mxu0 %v1609
      %1776 = vmatprep.subr.mxu0 %v1612
      %1777 = vmatpush1.msra.mxu0 %v1611
      %1778 = vmatprep.subr.mxu0 0.0
      %1779 = vmatpush1.msra.mxu0 0.0
      %1780 = vmatprep.subr.mxu0 0.0
      %1781 = vmatpush1.msra.mxu0 0.0
      %1782 = vmatprep.subr.mxu0 0.0
      %1783 = vmatpush1.msra.mxu0 0.0
      %1784 = vmatprep.subr.mxu0 0.0
      %1785 = vmatpush1.msra.mxu0 0.0
      %1786 = vmatprep.subr.mxu0 0.0
      %1787 = vmatpush1.msra.mxu0 0.0
      %1788 = vmatprep.subr.mxu0 0.0
      %1789 = vmatpush1.msra.mxu0 0.0
      %1790 = vmatprep.subr.mxu0 0.0
      %1791 = vmatpush1.msra.mxu0 0.0
      %1792 = vmatprep.subr.mxu0 0.0
      %1793 = vmatpush1.msra.mxu0 0.0
      %1794 = vmatprep.subr.mxu0 0.0
      %1795 = vmatpush1.msra.mxu0 0.0
      %1796 = vmatprep.subr.mxu0 0.0
      %1797 = vmatpush1.msra.mxu0 0.0
      %1798 = vmatprep.subr.mxu0 0.0
      %1799 = vmatpush1.msra.mxu0 0.0
      %1800 = vmatprep.subr.mxu0 0.0
      %1801 = vmatpush1.msra.mxu0 0.0
      %1802 = vmatprep.subr.mxu0 0.0
      %1803 = vmatpush1.msra.mxu0 0.0
      %1804 = vmatprep.subr.mxu0 0.0
      %1805 = vmatpush1.msra.mxu0 0.0
      %1806 = vmatprep.subr.mxu0 0.0
      %1807 = vmatpush1.msra.mxu0 0.0
      %1808 = vmatprep.subr.mxu0 0.0
      %1809 = vmatpush1.msra.mxu0 0.0
      %1810 = vmatprep.subr.mxu0 0.0
      %1811 = vmatpush1.msra.mxu0 0.0
      %1812 = vmatprep.subr.mxu0 0.0
      %1813 = vmatpush1.msra.mxu0 0.0
      %1814 = vmatprep.subr.mxu0 0.0
      %1815 = vmatpush1.msra.mxu0 0.0
      %1816 = vmatprep.subr.mxu0 0.0
      %1817 = vmatpush1.msra.mxu0 0.0
      %1818 = vmatprep.subr.mxu0 0.0
      %1819 = vmatpush1.msra.mxu0 0.0
      %1820 = vmatprep.subr.mxu0 0.0
      %1821 = vmatpush1.msra.mxu0 0.0
      %1822 = vmatprep.subr.mxu0 0.0
      %1823 = vmatpush1.msra.mxu0 0.0
      %1824 = vmatprep.subr.mxu0 0.0
      %1825 = vmatpush1.msra.mxu0 0.0
      %1826 = vmatprep.subr.mxu0 0.0
      %1827 = vmatpush1.msra.mxu0 0.0
      %1828 = vmatprep.subr.mxu0 0.0
      %1829 = vmatpush1.msra.mxu0 0.0
      %1830 = vmatprep.subr.mxu0 0.0
      %1831 = vmatpush1.msra.mxu0 0.0
      %1832 = vmatprep.subr.mxu0 0.0
      %1833 = vmatpush1.msra.mxu0 0.0
      %1834 = vmatprep.subr.mxu0 0.0
      %1835 = vmatpush1.msra.mxu0 0.0
      %1836 = vmatprep.subr.mxu0 0.0
      %1837 = vmatpush1.msra.mxu0 0.0
      %1838 = vmatprep.mubr.f32.mxu0 0.0
      %1839 = vmatmul.mubr.f32.gmra.mrb[0].mxu0 %v1751
      %v1840 = vpop.f32.mrb[0].mxu0
      %v1841 = vadd.f32 0.0, %v1840
      %v1842 = vpop.f32.mrb[0].mxu0
      %v1843 = vadd.f32 0.0, %v1842
      %1844 = vmatprep.mubr.f32.mxu0 0.0
      %1845 = vmatmul.mubr.f32.gmra.mrb[0].mxu0 %v1754
      %v1846 = vpop.f32.mrb[0].mxu0
      %v1847 = vadd.f32 0.0, %v1846
      %v1848 = vpop.f32.mrb[0].mxu0
      %v1849 = vadd.f32 0.0, %v1848
      %1850 = vmatprep.mubr.f32.mxu0 0.0
      %1851 = vmatmul.mubr.f32.gmra.mrb[0].mxu0 %v1757
      %v1852 = vpop.f32.mrb[0].mxu0
      %v1853 = vadd.f32 0.0, %v1852
      %v1854 = vpop.f32.mrb[0].mxu0
      %v1855 = vadd.f32 0.0, %v1854
      %1856 = vmatprep.mubr.f32.mxu0 0.0
      %1857 = vmatmul.mubr.f32.gmra.mrb[0].mxu0 %v1760
      %v1858 = vpop.f32.mrb[0].mxu0
      %v1859 = vadd.f32 0.0, %v1858
      %v1860 = vpop.f32.mrb[0].mxu0
      %v1861 = vadd.f32 0.0, %v1860
      %1862 = vmatprep.mubr.f32.mxu0 0.0
      %1863 = vmatmul.mubr.f32.gmra.mrb[0].mxu0 %v1763
      %v1864 = vpop.f32.mrb[0].mxu0
      %v1865 = vadd.f32 0.0, %v1864
      %v1866 = vpop.f32.mrb[0].mxu0
      %v1867 = vadd.f32 0.0, %v1866
      %1868 = vmatprep.mubr.f32.mxu0 0.0
      %1869 = vmatmul.mubr.f32.gmra.mrb[0].mxu0 %v1766
      %v1870 = vpop.f32.mrb[0].mxu0
      %v1871 = vadd.f32 0.0, %v1870
      %v1872 = vpop.f32.mrb[0].mxu0
      %v1873 = vadd.f32 0.0, %v1872
      %1874 = vmatprep.mubr.f32.mxu0 0.0
      %1875 = vmatmul.mubr.f32.gmra.mrb[0].mxu0 %v1769
      %v1876 = vpop.f32.mrb[0].mxu0
      %v1877 = vadd.f32 0.0, %v1876
      %v1878 = vpop.f32.mrb[0].mxu0
      %v1879 = vadd.f32 0.0, %v1878
      %1880 = vmatprep.mubr.f32.mxu0 0.0
      %1881 = vmatmul.mubr.f32.gmra.mrb[0].mxu0 %v1772
      %v1882 = vpop.f32.mrb[0].mxu0
      %v1883 = vadd.f32 0.0, %v1882
      %v1884 = vpop.f32.mrb[0].mxu0
      %v1885 = vadd.f32 0.0, %v1884
      %1886 = vdwg.mxu0
      %v1887 = vmul.f32 %v1841, %v1704
      %v1888 = vmul.f32 %v1843, %v1706
      %v1889 = vmul.f32 %v1847, %v1710
      %v1890 = vmul.f32 %v1849, %v1712
      %v1891 = vmul.f32 %v1853, %v1716
      %v1892 = vmul.f32 %v1855, %v1718
      %v1893 = vmul.f32 %v1859, %v1722
      %v1894 = vmul.f32 %v1861, %v1724
      %v1895 = vmul.f32 %v1865, %v1728
      %v1896 = vmul.f32 %v1867, %v1730
      %v1897 = vmul.f32 %v1871, %v1734
      %v1898 = vmul.f32 %v1873, %v1736
      %v1899 = vmul.f32 %v1877, %v1740
      %v1900 = vmul.f32 %v1879, %v1742
      %v1901 = vmul.f32 %v1883, %v1746
      %v1902 = vmul.f32 %v1885, %v1748
      %v1904 = vsel %vm1124, %v1443, 0
      %1906 = vmatprep.subr.mxu0 %v1888
      %1907 = vmatpush1.msra.mxu0 %v1887
      %1908 = vmatprep.subr.mxu0 %v1890
      %1909 = vmatpush1.msra.mxu0 %v1889
      %1910 = vmatprep.subr.mxu0 %v1892
      %1911 = vmatpush1.msra.mxu0 %v1891
      %1912 = vmatprep.subr.mxu0 %v1894
      %1913 = vmatpush1.msra.mxu0 %v1893
      %1914 = vmatprep.subr.mxu0 %v1896
      %1915 = vmatpush1.msra.mxu0 %v1895
      %1916 = vmatprep.subr.mxu0 %v1898
      %1917 = vmatpush1.msra.mxu0 %v1897
      %1918 = vmatprep.subr.mxu0 %v1900
      %1919 = vmatpush1.msra.mxu0 %v1899
      %1920 = vmatprep.subr.mxu0 %v1902
      %1921 = vmatpush1.msra.mxu0 %v1901
      %1922 = vmatprep.subr.mxu0 0.0
      %1923 = vmatpush1.msra.mxu0 0.0
      %1924 = vmatprep.subr.mxu0 0.0
      %1925 = vmatpush1.msra.mxu0 0.0
      %1926 = vmatprep.subr.mxu0 0.0
      %1927 = vmatpush1.msra.mxu0 0.0
      %1928 = vmatprep.subr.mxu0 0.0
      %1929 = vmatpush1.msra.mxu0 0.0
      %1930 = vmatprep.subr.mxu0 0.0
      %1931 = vmatpush1.msra.mxu0 0.0
      %1932 = vmatprep.subr.mxu0 0.0
      %1933 = vmatpush1.msra.mxu0 0.0
      %1934 = vmatprep.subr.mxu0 0.0
      %1935 = vmatpush1.msra.mxu0 0.0
      %1936 = vmatprep.subr.mxu0 0.0
      %1937 = vmatpush1.msra.mxu0 0.0
      %1938 = vmatprep.subr.mxu0 0.0
      %1939 = vmatpush1.msra.mxu0 0.0
      %1940 = vmatprep.subr.mxu0 0.0
      %1941 = vmatpush1.msra.mxu0 0.0
      %1942 = vmatprep.subr.mxu0 0.0
      %1943 = vmatpush1.msra.mxu0 0.0
      %1944 = vmatprep.subr.mxu0 0.0
      %1945 = vmatpush1.msra.mxu0 0.0
      %1946 = vmatprep.subr.mxu0 0.0
      %1947 = vmatpush1.msra.mxu0 0.0
      %1948 = vmatprep.subr.mxu0 0.0
      %1949 = vmatpush1.msra.mxu0 0.0
      %1950 = vmatprep.subr.mxu0 0.0
      %1951 = vmatpush1.msra.mxu0 0.0
      %1952 = vmatprep.subr.mxu0 0.0
      %1953 = vmatpush1.msra.mxu0 0.0
      %1954 = vmatprep.subr.mxu0 0.0
      %1955 = vmatpush1.msra.mxu0 0.0
      %1956 = vmatprep.subr.mxu0 0.0
      %1957 = vmatpush1.msra.mxu0 0.0
      %1958 = vmatprep.subr.mxu0 0.0
      %1959 = vmatpush1.msra.mxu0 0.0
      %1960 = vmatprep.subr.mxu0 0.0
      %1961 = vmatpush1.msra.mxu0 0.0
      %1962 = vmatprep.subr.mxu0 0.0
      %1963 = vmatpush1.msra.mxu0 0.0
      %1964 = vmatprep.subr.mxu0 0.0
      %1965 = vmatpush1.msra.mxu0 0.0
      %1966 = vmatprep.subr.mxu0 0.0
      %1967 = vmatpush1.msra.mxu0 0.0
      %1968 = vmatprep.subr.mxu0 0.0
      %1969 = vmatpush1.msra.mxu0 0.0
      %1970 = vmatprep.mubr.f32.mxu0 0.0
      %1971 = vmatmul.mubr.f32.gmra.mrb[0].mxu0 %v1904
      %v1972 = vpop.f32.mrb[0].mxu0
      %v1973 = vadd.f32 0.0, %v1972
      %v1974 = vpop.f32.mrb[0].mxu0
      %v1975 = vadd.f32 0.0, %v1974
      %1976 = vdwg.mxu0
      %v1977 = vld [vmem:[%s429] sm:$0xff]
      %v1978 = vld [vmem:[%s429 + $0x8] sm:$0xff]
      %v1979 = vld [vmem:[%s429 + $0x10] sm:$0xff]
      %v1980 = vld [vmem:[%s429 + $0x18] sm:$0xff]
      %v1981 = vld [vmem:[%s429 + $0x20] sm:$0xff]
      %v1982 = vld [vmem:[%s429 + $0x28] sm:$0xff]
      %v1983 = vld [vmem:[%s429 + $0x30] sm:$0xff]
      %v1984 = vld [vmem:[%s429 + $0x38] sm:$0xff]
      %v1985 = vcombine.high %v1470, %v1470
      %v1987 = vadd.f32 %v1429, %v1985
      %v1988 = vadd.f32 %v1987, 1.0
      %v1989 = vmul.f32 %v1988, 7.5
      %v1990 = vcombine.high %v1482, %v1482
      %v1992 = vadd.f32 %v1431, %v1990
      %v1993 = vadd.f32 %v1992, 1.0
      %v1994 = vmul.f32 %v1993, 7.5
      %v1995 = vfloor.f32 %v1989
      %v1996 = vcvt.f32.s32.to.zero.pseudo %v1995
      %v1997 = vsub.f32 %v1989, %v1995
      %v1998 = vlaneseq
      %v1999 = vshrl.u32 %v1998, 7
      %v2000 = vsub.s32 0, %v1999
      %v2001 = vrot.slane %v1996, %v2000
      %v2002 = vlaneseq
      %v2003 = vshrl.u32 %v2002, 7
      %v2004 = vsub.s32 1, %v2003
      %v2005 = vrot.slane %v1996, %v2004
      %vm2006 = vcmp.eq.s32.totalorder %v1433, %v2001
      %vm2007 = vcmp.eq.s32.totalorder %v1433, %v2005
      %vm2008 = vcmp.eq.s32.totalorder %v1434, %v2001
      %vm2009 = vcmp.eq.s32.totalorder %v1434, %v2005
      %v2010 = vsub.f32 1.0, %v1997
      %v2012 = vlaneseq
      %v2013 = vshrl.u32 %v2012, 7
      %v2014 = vsub.s32 0, %v2013
      %v2015 = vrot.slane %v2010, %v2014
      %v2016 = vlaneseq
      %v2017 = vshrl.u32 %v2016, 7
      %v2018 = vsub.s32 1, %v2017
      %v2019 = vrot.slane %v2010, %v2018
      %v2022 = vsel %vm2006, %v2015, 0.0
      %v2023 = vsel %vm2007, %v2019, 0.0
      %v2024 = vsel %vm2008, %v2015, 0.0
      %v2025 = vsel %vm2009, %v2019, 0.0
      %v2026 = vadd.s32 %v1996, 1
      %v2027 = vlaneseq
      %v2028 = vshrl.u32 %v2027, 7
      %v2029 = vsub.s32 0, %v2028
      %v2030 = vrot.slane %v2026, %v2029
      %v2031 = vlaneseq
      %v2032 = vshrl.u32 %v2031, 7
      %v2033 = vsub.s32 1, %v2032
      %v2034 = vrot.slane %v2026, %v2033
      %vm2035 = vcmp.eq.s32.totalorder %v1433, %v2030
      %vm2036 = vcmp.eq.s32.totalorder %v1433, %v2034
      %vm2037 = vcmp.eq.s32.totalorder %v1434, %v2030
      %vm2038 = vcmp.eq.s32.totalorder %v1434, %v2034
      %v2040 = vlaneseq
      %v2041 = vshrl.u32 %v2040, 7
      %v2042 = vsub.s32 0, %v2041
      %v2043 = vrot.slane %v1997, %v2042
      %v2044 = vlaneseq
      %v2045 = vshrl.u32 %v2044, 7
      %v2046 = vsub.s32 1, %v2045
      %v2047 = vrot.slane %v1997, %v2046
      %v2050 = vsel %vm2035, %v2043, 0.0
      %v2051 = vsel %vm2036, %v2047, 0.0
      %v2052 = vsel %vm2037, %v2043, 0.0
      %v2053 = vsel %vm2038, %v2047, 0.0
      %v2054 = vadd.f32 %v2022, %v2050
      %v2055 = vadd.f32 %v2023, %v2051
      %v2056 = vadd.f32 %v2024, %v2052
      %v2057 = vadd.f32 %v2025, %v2053
      %v2058 = vfloor.f32 %v1994
      %v2059 = vcvt.f32.s32.to.zero.pseudo %v2058
      %v2060 = vsub.f32 %v1994, %v2058
      %v2061 = vlaneseq
      %v2062 = vshrl.u32 %v2061, 7
      %v2063 = vsub.s32 0, %v2062
      %v2064 = vrot.slane %v2059, %v2063
      %v2065 = vlaneseq
      %v2066 = vshrl.u32 %v2065, 7
      %v2067 = vsub.s32 1, %v2066
      %v2068 = vrot.slane %v2059, %v2067
      %vm2069 = vcmp.eq.s32.totalorder %v1433, %v2064
      %vm2070 = vcmp.eq.s32.totalorder %v1433, %v2068
      %vm2071 = vcmp.eq.s32.totalorder %v1434, %v2064
      %vm2072 = vcmp.eq.s32.totalorder %v1434, %v2068
      %v2073 = vsub.f32 1.0, %v2060
      %v2075 = vlaneseq
      %v2076 = vshrl.u32 %v2075, 7
      %v2077 = vsub.s32 0, %v2076
      %v2078 = vrot.slane %v2073, %v2077
      %v2079 = vlaneseq
      %v2080 = vshrl.u32 %v2079, 7
      %v2081 = vsub.s32 1, %v2080
      %v2082 = vrot.slane %v2073, %v2081
      %v2085 = vsel %vm2069, %v2078, 0.0
      %v2086 = vsel %vm2070, %v2082, 0.0
      %v2087 = vsel %vm2071, %v2078, 0.0
      %v2088 = vsel %vm2072, %v2082, 0.0
      %v2089 = vadd.s32 %v2059, 1
      %v2090 = vlaneseq
      %v2091 = vshrl.u32 %v2090, 7
      %v2092 = vsub.s32 0, %v2091
      %v2093 = vrot.slane %v2089, %v2092
      %v2094 = vlaneseq
      %v2095 = vshrl.u32 %v2094, 7
      %v2096 = vsub.s32 1, %v2095
      %v2097 = vrot.slane %v2089, %v2096
      %vm2098 = vcmp.eq.s32.totalorder %v1433, %v2093
      %vm2099 = vcmp.eq.s32.totalorder %v1433, %v2097
      %vm2100 = vcmp.eq.s32.totalorder %v1434, %v2093
      %vm2101 = vcmp.eq.s32.totalorder %v1434, %v2097
      %v2103 = vlaneseq
      %v2104 = vshrl.u32 %v2103, 7
      %v2105 = vsub.s32 0, %v2104
      %v2106 = vrot.slane %v2060, %v2105
      %v2107 = vlaneseq
      %v2108 = vshrl.u32 %v2107, 7
      %v2109 = vsub.s32 1, %v2108
      %v2110 = vrot.slane %v2060, %v2109
      %v2113 = vsel %vm2098, %v2106, 0.0
      %v2114 = vsel %vm2099, %v2110, 0.0
      %v2115 = vsel %vm2100, %v2106, 0.0
      %v2116 = vsel %vm2101, %v2110, 0.0
      %v2117 = vadd.f32 %v2085, %v2113
      %v2118 = vadd.f32 %v2086, %v2114
      %v2119 = vadd.f32 %v2087, %v2115
      %v2120 = vadd.f32 %v2088, %v2116
      %v2122 = vsel %vm635, %v1977, 0
      %v2125 = vsel %vm635, %v1978, 0
      %v2128 = vsel %vm635, %v1979, 0
      %v2131 = vsel %vm635, %v1980, 0
      %v2134 = vsel %vm635, %v1981, 0
      %v2137 = vsel %vm635, %v1982, 0
      %v2140 = vsel %vm635, %v1983, 0
      %v2143 = vsel %vm635, %v1984, 0
      %2145 = vmatprep.subr.mxu0 %v2055
      %2146 = vmatpush1.msra.mxu0 %v2054
      %2147 = vmatprep.subr.mxu0 %v2057
      %2148 = vmatpush1.msra.mxu0 %v2056
      %2149 = vmatprep.subr.mxu0 0.0
      %2150 = vmatpush1.msra.mxu0 0.0
      %2151 = vmatprep.subr.mxu0 0.0
      %2152 = vmatpush1.msra.mxu0 0.0
      %2153 = vmatprep.subr.mxu0 0.0
      %2154 = vmatpush1.msra.mxu0 0.0
      %2155 = vmatprep.subr.mxu0 0.0
      %2156 = vmatpush1.msra.mxu0 0.0
      %2157 = vmatprep.subr.mxu0 0.0
      %2158 = vmatpush1.msra.mxu0 0.0
      %2159 = vmatprep.subr.mxu0 0.0
      %2160 = vmatpush1.msra.mxu0 0.0
      %2161 = vmatprep.subr.mxu0 0.0
      %2162 = vmatpush1.msra.mxu0 0.0
      %2163 = vmatprep.subr.mxu0 0.0
      %2164 = vmatpush1.msra.mxu0 0.0
      %2165 = vmatprep.subr.mxu0 0.0
      %2166 = vmatpush1.msra.mxu0 0.0
      %2167 = vmatprep.subr.mxu0 0.0
      %2168 = vmatpush1.msra.mxu0 0.0
      %2169 = vmatprep.subr.mxu0 0.0
      %2170 = vmatpush1.msra.mxu0 0.0
      %2171 = vmatprep.subr.mxu0 0.0
      %2172 = vmatpush1.msra.mxu0 0.0
      %2173 = vmatprep.subr.mxu0 0.0
      %2174 = vmatpush1.msra.mxu0 0.0
      %2175 = vmatprep.subr.mxu0 0.0
      %2176 = vmatpush1.msra.mxu0 0.0
      %2177 = vmatprep.subr.mxu0 0.0
      %2178 = vmatpush1.msra.mxu0 0.0
      %2179 = vmatprep.subr.mxu0 0.0
      %2180 = vmatpush1.msra.mxu0 0.0
      %2181 = vmatprep.subr.mxu0 0.0
      %2182 = vmatpush1.msra.mxu0 0.0
      %2183 = vmatprep.subr.mxu0 0.0
      %2184 = vmatpush1.msra.mxu0 0.0
      %2185 = vmatprep.subr.mxu0 0.0
      %2186 = vmatpush1.msra.mxu0 0.0
      %2187 = vmatprep.subr.mxu0 0.0
      %2188 = vmatpush1.msra.mxu0 0.0
      %2189 = vmatprep.subr.mxu0 0.0
      %2190 = vmatpush1.msra.mxu0 0.0
      %2191 = vmatprep.subr.mxu0 0.0
      %2192 = vmatpush1.msra.mxu0 0.0
      %2193 = vmatprep.subr.mxu0 0.0
      %2194 = vmatpush1.msra.mxu0 0.0
      %2195 = vmatprep.subr.mxu0 0.0
      %2196 = vmatpush1.msra.mxu0 0.0
      %2197 = vmatprep.subr.mxu0 0.0
      %2198 = vmatpush1.msra.mxu0 0.0
      %2199 = vmatprep.subr.mxu0 0.0
      %2200 = vmatpush1.msra.mxu0 0.0
      %2201 = vmatprep.subr.mxu0 0.0
      %2202 = vmatpush1.msra.mxu0 0.0
      %2203 = vmatprep.subr.mxu0 0.0
      %2204 = vmatpush1.msra.mxu0 0.0
      %2205 = vmatprep.subr.mxu0 0.0
      %2206 = vmatpush1.msra.mxu0 0.0
      %2207 = vmatprep.subr.mxu0 0.0
      %2208 = vmatpush1.msra.mxu0 0.0
      %2209 = vmatprep.mubr.f32.mxu0 0.0
      %2210 = vmatmul.mubr.f32.gmra.mrb[0].mxu0 %v2122
      %v2211 = vpop.f32.mrb[0].mxu0
      %v2212 = vadd.f32 0.0, %v2211
      %v2213 = vpop.f32.mrb[0].mxu0
      %v2214 = vadd.f32 0.0, %v2213
      %2215 = vmatprep.mubr.f32.mxu0 0.0
      %2216 = vmatmul.mubr.f32.gmra.mrb[0].mxu0 %v2125
      %v2217 = vpop.f32.mrb[0].mxu0
      %v2218 = vadd.f32 0.0, %v2217
      %v2219 = vpop.f32.mrb[0].mxu0
      %v2220 = vadd.f32 0.0, %v2219
      %2221 = vmatprep.mubr.f32.mxu0 0.0
      %2222 = vmatmul.mubr.f32.gmra.mrb[0].mxu0 %v2128
      %v2223 = vpop.f32.mrb[0].mxu0
      %v2224 = vadd.f32 0.0, %v2223
      %v2225 = vpop.f32.mrb[0].mxu0
      %v2226 = vadd.f32 0.0, %v2225
      %2227 = vmatprep.mubr.f32.mxu0 0.0
      %2228 = vmatmul.mubr.f32.gmra.mrb[0].mxu0 %v2131
      %v2229 = vpop.f32.mrb[0].mxu0
      %v2230 = vadd.f32 0.0, %v2229
      %v2231 = vpop.f32.mrb[0].mxu0
      %v2232 = vadd.f32 0.0, %v2231
      %2233 = vmatprep.mubr.f32.mxu0 0.0
      %2234 = vmatmul.mubr.f32.gmra.mrb[0].mxu0 %v2134
      %v2235 = vpop.f32.mrb[0].mxu0
      %v2236 = vadd.f32 0.0, %v2235
      %v2237 = vpop.f32.mrb[0].mxu0
      %v2238 = vadd.f32 0.0, %v2237
      %2239 = vmatprep.mubr.f32.mxu0 0.0
      %2240 = vmatmul.mubr.f32.gmra.mrb[0].mxu0 %v2137
      %v2241 = vpop.f32.mrb[0].mxu0
      %v2242 = vadd.f32 0.0, %v2241
      %v2243 = vpop.f32.mrb[0].mxu0
      %v2244 = vadd.f32 0.0, %v2243
      %2245 = vmatprep.mubr.f32.mxu0 0.0
      %2246 = vmatmul.mubr.f32.gmra.mrb[0].mxu0 %v2140
      %v2247 = vpop.f32.mrb[0].mxu0
      %v2248 = vadd.f32 0.0, %v2247
      %v2249 = vpop.f32.mrb[0].mxu0
      %v2250 = vadd.f32 0.0, %v2249
      %2251 = vmatprep.mubr.f32.mxu0 0.0
      %2252 = vmatmul.mubr.f32.gmra.mrb[0].mxu0 %v2143
      %v2253 = vpop.f32.mrb[0].mxu0
      %v2254 = vadd.f32 0.0, %v2253
      %v2255 = vpop.f32.mrb[0].mxu0
      %v2256 = vadd.f32 0.0, %v2255
      %2257 = vdwg.mxu0
      %2258 = vmatprep.subr.mxu0 %v2118
      %2259 = vmatpush1.msra.mxu0 %v2117
      %2260 = vmatprep.subr.mxu0 %v2120
      %2261 = vmatpush1.msra.mxu0 %v2119
      %2262 = vmatprep.subr.mxu0 0.0
      %2263 = vmatpush1.msra.mxu0 0.0
      %2264 = vmatprep.subr.mxu0 0.0
      %2265 = vmatpush1.msra.mxu0 0.0
      %2266 = vmatprep.subr.mxu0 0.0
      %2267 = vmatpush1.msra.mxu0 0.0
      %2268 = vmatprep.subr.mxu0 0.0
      %2269 = vmatpush1.msra.mxu0 0.0
      %2270 = vmatprep.subr.mxu0 0.0
      %2271 = vmatpush1.msra.mxu0 0.0
      %2272 = vmatprep.subr.mxu0 0.0
      %2273 = vmatpush1.msra.mxu0 0.0
      %2274 = vmatprep.subr.mxu0 0.0
      %2275 = vmatpush1.msra.mxu0 0.0
      %2276 = vmatprep.subr.mxu0 0.0
      %2277 = vmatpush1.msra.mxu0 0.0
      %2278 = vmatprep.subr.mxu0 0.0
      %2279 = vmatpush1.msra.mxu0 0.0
      %2280 = vmatprep.subr.mxu0 0.0
      %2281 = vmatpush1.msra.mxu0 0.0
      %2282 = vmatprep.subr.mxu0 0.0
      %2283 = vmatpush1.msra.mxu0 0.0
      %2284 = vmatprep.subr.mxu0 0.0
      %2285 = vmatpush1.msra.mxu0 0.0
      %2286 = vmatprep.subr.mxu0 0.0
      %2287 = vmatpush1.msra.mxu0 0.0
      %2288 = vmatprep.subr.mxu0 0.0
      %2289 = vmatpush1.msra.mxu0 0.0
      %2290 = vmatprep.subr.mxu0 0.0
      %2291 = vmatpush1.msra.mxu0 0.0
      %2292 = vmatprep.subr.mxu0 0.0
      %2293 = vmatpush1.msra.mxu0 0.0
      %2294 = vmatprep.subr.mxu0 0.0
      %2295 = vmatpush1.msra.mxu0 0.0
      %2296 = vmatprep.subr.mxu0 0.0
      %2297 = vmatpush1.msra.mxu0 0.0
      %2298 = vmatprep.subr.mxu0 0.0
      %2299 = vmatpush1.msra.mxu0 0.0
      %2300 = vmatprep.subr.mxu0 0.0
      %2301 = vmatpush1.msra.mxu0 0.0
      %2302 = vmatprep.subr.mxu0 0.0
      %2303 = vmatpush1.msra.mxu0 0.0
      %2304 = vmatprep.subr.mxu0 0.0
      %2305 = vmatpush1.msra.mxu0 0.0
      %2306 = vmatprep.subr.mxu0 0.0
      %2307 = vmatpush1.msra.mxu0 0.0
      %2308 = vmatprep.subr.mxu0 0.0
      %2309 = vmatpush1.msra.mxu0 0.0
      %2310 = vmatprep.subr.mxu0 0.0
      %2311 = vmatpush1.msra.mxu0 0.0
      %2312 = vmatprep.subr.mxu0 0.0
      %2313 = vmatpush1.msra.mxu0 0.0
      %2314 = vmatprep.subr.mxu0 0.0
      %2315 = vmatpush1.msra.mxu0 0.0
      %2316 = vmatprep.subr.mxu0 0.0
      %2317 = vmatpush1.msra.mxu0 0.0
      %2318 = vmatprep.subr.mxu0 0.0
      %2319 = vmatpush1.msra.mxu0 0.0
      %2320 = vmatprep.subr.mxu0 0.0
      %2321 = vmatpush1.msra.mxu0 0.0
      %2322 = vmatprep.mubr.f32.mxu0 0.0
      %2323 = vmatmul.mubr.f32.gmra.mrb[0].mxu0 %v1751
      %v2324 = vpop.f32.mrb[0].mxu0
      %v2325 = vadd.f32 0.0, %v2324
      %v2326 = vpop.f32.mrb[0].mxu0
      %v2327 = vadd.f32 0.0, %v2326
      %2328 = vmatprep.mubr.f32.mxu0 0.0
      %2329 = vmatmul.mubr.f32.gmra.mrb[0].mxu0 %v1754
      %v2330 = vpop.f32.mrb[0].mxu0
      %v2331 = vadd.f32 0.0, %v2330
      %v2332 = vpop.f32.mrb[0].mxu0
      %v2333 = vadd.f32 0.0, %v2332
      %2334 = vmatprep.mubr.f32.mxu0 0.0
      %2335 = vmatmul.mubr.f32.gmra.mrb[0].mxu0 %v1757
      %v2336 = vpop.f32.mrb[0].mxu0
      %v2337 = vadd.f32 0.0, %v2336
      %v2338 = vpop.f32.mrb[0].mxu0
      %v2339 = vadd.f32 0.0, %v2338
      %2340 = vmatprep.mubr.f32.mxu0 0.0
      %2341 = vmatmul.mubr.f32.gmra.mrb[0].mxu0 %v1760
      %v2342 = vpop.f32.mrb[0].mxu0
      %v2343 = vadd.f32 0.0, %v2342
      %v2344 = vpop.f32.mrb[0].mxu0
      %v2345 = vadd.f32 0.0, %v2344
      %2346 = vmatprep.mubr.f32.mxu0 0.0
      %2347 = vmatmul.mubr.f32.gmra.mrb[0].mxu0 %v1763
      %v2348 = vpop.f32.mrb[0].mxu0
      %v2349 = vadd.f32 0.0, %v2348
      %v2350 = vpop.f32.mrb[0].mxu0
      %v2351 = vadd.f32 0.0, %v2350
      %2352 = vmatprep.mubr.f32.mxu0 0.0
      %2353 = vmatmul.mubr.f32.gmra.mrb[0].mxu0 %v1766
      %v2354 = vpop.f32.mrb[0].mxu0
      %v2355 = vadd.f32 0.0, %v2354
      %v2356 = vpop.f32.mrb[0].mxu0
      %v2357 = vadd.f32 0.0, %v2356
      %2358 = vmatprep.mubr.f32.mxu0 0.0
      %2359 = vmatmul.mubr.f32.gmra.mrb[0].mxu0 %v1769
      %v2360 = vpop.f32.mrb[0].mxu0
      %v2361 = vadd.f32 0.0, %v2360
      %v2362 = vpop.f32.mrb[0].mxu0
      %v2363 = vadd.f32 0.0, %v2362
      %2364 = vmatprep.mubr.f32.mxu0 0.0
      %2365 = vmatmul.mubr.f32.gmra.mrb[0].mxu0 %v1772
      %v2366 = vpop.f32.mrb[0].mxu0
      %v2367 = vadd.f32 0.0, %v2366
      %v2368 = vpop.f32.mrb[0].mxu0
      %v2369 = vadd.f32 0.0, %v2368
      %2370 = vdwg.mxu0
      %v2371 = vmul.f32 %v2325, %v2212
      %v2372 = vmul.f32 %v2327, %v2214
      %v2373 = vmul.f32 %v2331, %v2218
      %v2374 = vmul.f32 %v2333, %v2220
      %v2375 = vmul.f32 %v2337, %v2224
      %v2376 = vmul.f32 %v2339, %v2226
      %v2377 = vmul.f32 %v2343, %v2230
      %v2378 = vmul.f32 %v2345, %v2232
      %v2379 = vmul.f32 %v2349, %v2236
      %v2380 = vmul.f32 %v2351, %v2238
      %v2381 = vmul.f32 %v2355, %v2242
      %v2382 = vmul.f32 %v2357, %v2244
      %v2383 = vmul.f32 %v2361, %v2248
      %v2384 = vmul.f32 %v2363, %v2250
      %v2385 = vmul.f32 %v2367, %v2254
      %v2386 = vmul.f32 %v2369, %v2256
      %2387 = vmatprep.subr.mxu0 %v2372
      %2388 = vmatpush1.msra.mxu0 %v2371
      %2389 = vmatprep.subr.mxu0 %v2374
      %2390 = vmatpush1.msra.mxu0 %v2373
      %2391 = vmatprep.subr.mxu0 %v2376
      %2392 = vmatpush1.msra.mxu0 %v2375
      %2393 = vmatprep.subr.mxu0 %v2378
      %2394 = vmatpush1.msra.mxu0 %v2377
      %2395 = vmatprep.subr.mxu0 %v2380
      %2396 = vmatpush1.msra.mxu0 %v2379
      %2397 = vmatprep.subr.mxu0 %v2382
      %2398 = vmatpush1.msra.mxu0 %v2381
      %2399 = vmatprep.subr.mxu0 %v2384
      %2400 = vmatpush1.msra.mxu0 %v2383
      %2401 = vmatprep.subr.mxu0 %v2386
      %2402 = vmatpush1.msra.mxu0 %v2385
      %2403 = vmatprep.subr.mxu0 0.0
      %2404 = vmatpush1.msra.mxu0 0.0
      %2405 = vmatprep.subr.mxu0 0.0
      %2406 = vmatpush1.msra.mxu0 0.0
      %2407 = vmatprep.subr.mxu0 0.0
      %2408 = vmatpush1.msra.mxu0 0.0
      %2409 = vmatprep.subr.mxu0 0.0
      %2410 = vmatpush1.msra.mxu0 0.0
      %2411 = vmatprep.subr.mxu0 0.0
      %2412 = vmatpush1.msra.mxu0 0.0
      %2413 = vmatprep.subr.mxu0 0.0
      %2414 = vmatpush1.msra.mxu0 0.0
      %2415 = vmatprep.subr.mxu0 0.0
      %2416 = vmatpush1.msra.mxu0 0.0
      %2417 = vmatprep.subr.mxu0 0.0
      %2418 = vmatpush1.msra.mxu0 0.0
      %2419 = vmatprep.subr.mxu0 0.0
      %2420 = vmatpush1.msra.mxu0 0.0
      %2421 = vmatprep.subr.mxu0 0.0
      %2422 = vmatpush1.msra.mxu0 0.0
      %2423 = vmatprep.subr.mxu0 0.0
      %2424 = vmatpush1.msra.mxu0 0.0
      %2425 = vmatprep.subr.mxu0 0.0
      %2426 = vmatpush1.msra.mxu0 0.0
      %2427 = vmatprep.subr.mxu0 0.0
      %2428 = vmatpush1.msra.mxu0 0.0
      %2429 = vmatprep.subr.mxu0 0.0
      %2430 = vmatpush1.msra.mxu0 0.0
      %2431 = vmatprep.subr.mxu0 0.0
      %2432 = vmatpush1.msra.mxu0 0.0
      %2433 = vmatprep.subr.mxu0 0.0
      %2434 = vmatpush1.msra.mxu0 0.0
      %2435 = vmatprep.subr.mxu0 0.0
      %2436 = vmatpush1.msra.mxu0 0.0
      %2437 = vmatprep.subr.mxu0 0.0
      %2438 = vmatpush1.msra.mxu0 0.0
      %2439 = vmatprep.subr.mxu0 0.0
      %2440 = vmatpush1.msra.mxu0 0.0
      %2441 = vmatprep.subr.mxu0 0.0
      %2442 = vmatpush1.msra.mxu0 0.0
      %2443 = vmatprep.subr.mxu0 0.0
      %2444 = vmatpush1.msra.mxu0 0.0
      %2445 = vmatprep.subr.mxu0 0.0
      %2446 = vmatpush1.msra.mxu0 0.0
      %2447 = vmatprep.subr.mxu0 0.0
      %2448 = vmatpush1.msra.mxu0 0.0
      %2449 = vmatprep.subr.mxu0 0.0
      %2450 = vmatpush1.msra.mxu0 0.0
      %2451 = vmatprep.mubr.f32.mxu0 0.0
      %2452 = vmatmul.mubr.f32.gmra.mrb[0].mxu0 %v1904
      %v2453 = vpop.f32.mrb[0].mxu0
      %v2454 = vadd.f32 0.0, %v2453
      %v2455 = vpop.f32.mrb[0].mxu0
      %v2456 = vadd.f32 0.0, %v2455
      %2457 = vdwg.mxu0
      %v2461 = vrot.slane %v440, 4
      %v2462 = vrot.slane %v441, 4
      %v2463 = vrot.slane %v442, 4
      %2464 = vrot.lane.b32.xlu0 %v2461, 94
      %v2465 = vpop.permute.xlu0 %2464
      %2466 = vrot.lane.b32.xlu0 %v2462, 94
      %v2467 = vpop.permute.xlu0 %2466
      %2468 = vrot.lane.b32.xlu0 %v2463, 94
      %v2469 = vpop.permute.xlu0 %2468
      %v2470 = vsel %vm880, %v2465, %v2467
      %v2471 = vsel %vm880, %v2467, %v2469
      %v2474 = vsub.f32 %v1973, %v2470
      %v2475 = vsub.f32 %v1975, %v2471
      %v2478 = vcombine.low %v2474, %v2475
      %2480 = vst [vmem:[%s434] sm:$0xff] %v2478
      %2481 = vrot.lane.b32.xlu0 %v440, 94
      %v2482 = vpop.permute.xlu0 %2481
      %2483 = vrot.lane.b32.xlu0 %v441, 94
      %v2484 = vpop.permute.xlu0 %2483
      %2485 = vrot.lane.b32.xlu0 %v442, 94
      %v2486 = vpop.permute.xlu0 %2485
      %v2487 = vsel %vm880, %v2482, %v2484
      %v2488 = vsel %vm880, %v2484, %v2486
      %v2491 = vsub.f32 %v2454, %v2487
      %v2492 = vsub.f32 %v2456, %v2488
      %v2495 = vcombine.low %v2491, %v2492
      %2497 = vst [vmem:[%s439] sm:$0xff] %v2495
      %p2498 = scmp.lt.s32.totalorder %s23, 1
      %s2499 = scalar_select %p2498, %s23, 1
      %s2500 = smul.addr %s2499, 2
      %s2501 = smul.addr %s2500, 4
      %s2502 = scalar_lea.vmem %s10, %s2501
      %p2503 = scmp.lt.s32.totalorder %s23, 1
      %s2504 = scalar_select %p2503, %s23, 1
      %s2505 = smul.addr %s2504, 2
      %s2506 = smul.addr %s2505, 4
      %s2507 = scalar_lea.vmem %s11, %s2506
      // Predicated region
      $region61: #{fdaf_forward.1} parent=59 // pred_check
        %p2508 = pneg %p266
      $region62: #{fdaf_forward.1} parent=59 // pred_check_branch
        %2510 = sbr.rel (%p2508) target = $region64
      $region63: #{fdaf_forward.1} parent=59 // pred_region
        _
      $region64: #{fdaf_forward.1} parent=59 // pred_fallthru
        _
      // Predicated region
      $region65: #{fdaf_forward.1} parent=59 // pred_check
        %p2511 = pneg %p292
      $region66: #{fdaf_forward.1} parent=59 // pred_check_branch
        %2513 = sbr.rel (%p2511) target = $region68
      $region67: #{fdaf_forward.1} parent=59 // pred_region
        _
      $region68: #{fdaf_forward.1} parent=59 // pred_fallthru
        _
    $region60: #{fdaf_forward.1} parent=5 // pred_fallthru
      _
    %p2514 = scmp.le.s32.totalorder 2, %s18
    // Predicated region
    $region69: #{fdaf_forward.1} parent=5 // pred_check
      %p2515 = pneg %p2514
    $region70: #{fdaf_forward.1} parent=5 // pred_check_branch
      %2517 = sbr.rel (%p2515) target = $region72
    $region71: #{fdaf_forward.1} parent=5 // pred_region
      %s2518 = ssub.s32 %s18, 2
      // Predicated region
      $region73: #{fdaf_forward.1} parent=71 // pred_check
        %p2519 = pneg %p272
      $region74: #{fdaf_forward.1} parent=71 // pred_check_branch
        %2521 = sbr.rel (%p2519) target = $region76
      $region75: #{fdaf_forward.1} parent=71 // pred_region
        %p2522 = scmp.lt.s32.totalorder %s24, 1
        %s2523 = scalar_select %p2522, %s24, 1
        %s2524 = smul.addr %s2523, 2
        %s2525 = smul.addr %s2524, 4
        %s2526 = scalar_lea.vmem %s10, %s2525
      $region76: #{fdaf_forward.1} parent=71 // pred_fallthru
        _
      // Predicated region
      $region77: #{fdaf_forward.1} parent=71 // pred_check
        %p2527 = pneg %p298
      $region78: #{fdaf_forward.1} parent=71 // pred_check_branch
        %2529 = sbr.rel (%p2527) target = $region80
      $region79: #{fdaf_forward.1} parent=71 // pred_region
        %p2530 = scmp.lt.s32.totalorder %s24, 1
        %s2531 = scalar_select %p2530, %s24, 1
        %s2532 = smul.addr %s2531, 2
        %s2533 = smul.addr %s2532, 4
        %s2534 = scalar_lea.vmem %s11, %s2533
      $region80: #{fdaf_forward.1} parent=71 // pred_fallthru
        _
    $region72: #{fdaf_forward.1} parent=5 // pred_fallthru
      _
  $region6: #{fdaf_forward.1} parent=0 // loop_footer
    %s22 = sadd.s32 1, %s18
  $region7: #{fdaf_forward.1} parent=0 // loop_footer_branch
    %17 = sbr.rel target = $region3
  $region8: #{fdaf_forward.1} parent=0 // loop_exit
    _

</llo_original>
